<compile_context>
chip_gen: v7x
topology: tpu7x:2x2x1
jax: 0.10.0
libtpu: 0.0.40
codegen_flags: <defaults>
</compile_context>

<pallas_src>
import functools
import numpy as np
import jax
import jax.numpy as jnp
from jax.experimental import pallas as pl
from jax.experimental.pallas import tpu as pltpu

EPS = 1e-5                    # torch.nn.LayerNorm default eps
MASK_BIAS = -1e9              # finite mask bias (avoids -inf - (-inf) -> NaN)
VMEM_LIMIT = 32 * 1024 * 1024 # > v5e's 16 MiB default scope, < v7x's 64 MiB physical


def _pick_tile_m(m, target=256):
    """Largest row tile <= target that divides M (multiple of 8 when tiling)."""
    if m <= target:
        return m
    for t in range(target, 7, -8):
        if m % t == 0:
            return t
    return m


# ------------------------- kernel 1: QKV projection --------------------------

def _qkv_kernel(x_ref, wq_ref, wk_ref, wv_ref, bq_ref, bk_ref, bv_ref,
                q_ref, k_ref, v_ref):
    # x: (TM, E); weights pre-transposed to (E, E); biases (1, E).
    x = x_ref[...]
    q_ref[...] = (jnp.dot(x, wq_ref[...], preferred_element_type=jnp.float32)
                  + bq_ref[...]).astype(q_ref.dtype)
    k_ref[...] = (jnp.dot(x, wk_ref[...], preferred_element_type=jnp.float32)
                  + bk_ref[...]).astype(k_ref.dtype)
    v_ref[...] = (jnp.dot(x, wv_ref[...], preferred_element_type=jnp.float32)
                  + bv_ref[...]).astype(v_ref.dtype)


def pallas_qkv(x, wq, wk, wv, bq, bk, bv, *, tile_m):
    M, E = x.shape
    row_spec = pl.BlockSpec((tile_m, E), lambda i: (i, 0))
    w_spec = pl.BlockSpec((E, E), lambda i: (0, 0))   # resident across M tiles
    b_spec = pl.BlockSpec((1, E), lambda i: (0, 0))
    out = jax.ShapeDtypeStruct((M, E), jnp.float32)
    return pl.pallas_call(
        _qkv_kernel,
        out_shape=(out, out, out),
        grid=(M // tile_m,),
        in_specs=[row_spec, w_spec, w_spec, w_spec, b_spec, b_spec, b_spec],
        out_specs=(row_spec, row_spec, row_spec),
        compiler_params=pltpu.CompilerParams(
            dimension_semantics=("parallel",),
            vmem_limit_bytes=VMEM_LIMIT),
    )(x, wq, wk, wv, bq, bk, bv)


# ---------------- kernel 2: attention, one (B, S, Dh) block per head ---------

def _attn_kernel(q_ref, k_ref, v_ref, bias_ref, o_ref, *, inv_sqrt_dh):
    # q/k/v: (B, S, Dh) for one head (groups g = h*B + b are contiguous in g).
    # bias: (B, S) additive key mask (0 = keep, -1e9 = padded).
    q = q_ref[...] * inv_sqrt_dh                     # fold 1/sqrt(Dh) into Q
    s = jax.lax.dot_general(q, k_ref[...], (((2,), (2,)), ((0,), (0,))),
                            preferred_element_type=jnp.float32)      # (B, S, S)
    s = s + bias_ref[...][:, None, :]                # additive mask, no vsel
    m = jnp.max(s, axis=-1, keepdims=True)
    p = jnp.exp(s - m)
    denom = jnp.sum(p, axis=-1, keepdims=True)       # (B, S, 1)
    # deferred normalization: matmul first, then scale the (B,S,Dh) result
    ctx = jax.lax.dot_general(p, v_ref[...], (((2,), (1,)), ((0,), (0,))),
                              preferred_element_type=jnp.float32)    # (B, S, Dh)
    o_ref[...] = (ctx * (1.0 / denom)).astype(o_ref.dtype)


def pallas_attention(q, k, v, bias, num_head, head_dim):
    G, S, Dh = q.shape
    B = G // num_head
    inv = float(1.0 / np.sqrt(head_dim))
    grp_spec = pl.BlockSpec((B, S, Dh), lambda h: (h, 0, 0))
    bias_spec = pl.BlockSpec((B, S), lambda h: (0, 0))    # resident
    return pl.pallas_call(
        functools.partial(_attn_kernel, inv_sqrt_dh=inv),
        out_shape=jax.ShapeDtypeStruct((G, S, Dh), jnp.float32),
        grid=(num_head,),
        in_specs=[grp_spec, grp_spec, grp_spec, bias_spec],
        out_specs=grp_spec,
        compiler_params=pltpu.CompilerParams(
            dimension_semantics=("parallel",),
            vmem_limit_bytes=VMEM_LIMIT),
    )(q, k, v, bias)


# ------- kernel 3: out-proj + add&LN1 + FFN(GELU) + add&LN2 (fully fused) -----

def _tail_kernel(ctx_ref, x_ref, wo_ref, bo_ref, w1_ref, b1_ref, w2_ref, b2_ref,
                 g1_ref, be1_ref, g2_ref, be2_ref, o_ref):
    def layernorm(z, g, b):
        mu = jnp.mean(z, axis=-1, keepdims=True)
        c = z - mu
        var = jnp.mean(c * c, axis=-1, keepdims=True)
        return c * jax.lax.rsqrt(var + EPS) * g + b

    x = x_ref[...]
    attn = jnp.dot(ctx_ref[...], wo_ref[...],
                   preferred_element_type=jnp.float32) + bo_ref[...]
    # dropout1 -> identity (eval)
    h1 = layernorm(x + attn, g1_ref[...], be1_ref[...])
    ff = jnp.dot(h1, w1_ref[...], preferred_element_type=jnp.float32) + b1_ref[...]
    # exact erf-based GELU (torch.nn.GELU default)
    ff = 0.5 * ff * (1.0 + jax.lax.erf(ff * np.float32(1.0 / np.sqrt(2.0))))
    ff = jnp.dot(ff, w2_ref[...], preferred_element_type=jnp.float32) + b2_ref[...]
    # dropout2 -> identity (eval)
    o_ref[...] = layernorm(h1 + ff, g2_ref[...], be2_ref[...]).astype(o_ref.dtype)


def pallas_attn_out_ffn(ctx, x2, pp, *, tile_m):
    M, E = x2.shape
    FF = pp["w1"].shape[1]
    row_spec = pl.BlockSpec((tile_m, E), lambda i: (i, 0))
    const = lambda shape: pl.BlockSpec(shape, lambda i: (0, 0))   # resident weights
    return pl.pallas_call(
        _tail_kernel,
        out_shape=jax.ShapeDtypeStruct((M, E), jnp.float32),
        grid=(M // tile_m,),
        in_specs=[row_spec, row_spec,
                  const((E, E)), const((1, E)),
                  const((E, FF)), const((1, FF)),
                  const((FF, E)), const((1, E)),
                  const((1, E)), const((1, E)), const((1, E)), const((1, E))],
        out_specs=row_spec,
        compiler_params=pltpu.CompilerParams(
            dimension_semantics=("parallel",),
            vmem_limit_bytes=VMEM_LIMIT),
    )(ctx, x2, pp["wo"], pp["bo"], pp["w1"], pp["b1"], pp["w2"], pp["b2"],
      pp["g1"], pp["be1"], pp["g2"], pp["be2"])


# ----------------------------- parameter prep -------------------------------

def prepare_params(p):
    """One-time hoist of the nn.Linear weight transposes / bias reshapes."""
    return {
        "wq": p["wq"].T, "bq": p["bq"].reshape(1, -1),
        "wk": p["wk"].T, "bk": p["bk"].reshape(1, -1),
        "wv": p["wv"].T, "bv": p["bv"].reshape(1, -1),
        "wo": p["wo"].T, "bo": p["bo"].reshape(1, -1),
        "w1": p["w1"].T, "b1": p["b1"].reshape(1, -1),
        "w2": p["w2"].T, "b2": p["b2"].reshape(1, -1),
        "g1": p["g1"].reshape(1, -1), "be1": p["be1"].reshape(1, -1),
        "g2": p["g2"].reshape(1, -1), "be2": p["be2"].reshape(1, -1),
    }


# ----------------------------- Encoder layer --------------------------------

@functools.partial(jax.jit, static_argnames=("num_head",))
def encoder_layer_pallas(x, pad_mask, pp, num_head):
    B, S, E = x.shape
    Dh = E // num_head
    G = num_head * B
    M = B * S
    tile_m = _pick_tile_m(M)
    x2 = x.reshape(M, E)

    # (1) QKV projection, M-row tiled; q/k/v come out as contiguous (M, E) arrays.
    q, k, v = pallas_qkv(x2, pp["wq"], pp["wk"], pp["wv"],
                         pp["bq"], pp["bk"], pp["bv"], tile_m=tile_m)

    # Reference's quirky flat `.view(H, B, S, Dh)` head split (NOT a transpose):
    # a pure contiguous reshape of the (M, E) buffers -> no HBM copy.
    q = q.reshape(G, S, Dh)
    k = k.reshape(G, S, Dh)
    v = v.reshape(G, S, Dh)

    # Additive key-mask bias (B, S): 0 for real tokens, -1e9 for padded keys.
    # Groups g = h*B + b, so each per-head block sees batches in order -> the
    # (B, S) bias maps 1:1 onto the (B, S, Dh) group block.
    bias = jnp.where(pad_mask, jnp.float32(MASK_BIAS), jnp.float32(0.0))

    # (2) attention, one (B, S, Dh) block per head, heads sharded across cores.
    ctx = pallas_attention(q, k, v, bias, num_head, Dh)     # (G, S, Dh)
    ctx = ctx.reshape(M, E)                                  # flat view back (free)

    # (3) out-proj + add&LN1 + FFN(GELU) + add&LN2, fused in VMEM, M-row tiled.
    out = pallas_attn_out_ffn(ctx, x2, pp, tile_m=tile_m)    # (M, E)
    return out.reshape(B, S, E)


# -------------------------- pure-JAX reference -------------------------------

def encoder_layer_ref(x, pad_mask, p, num_head):
    B, S, E = x.shape
    Dh = E // num_head
    lin = lambda t, w, b: t @ w.T + b

    Q = lin(x, p["wq"], p["bq"]).reshape(num_head, B, S, Dh)
    K = lin(x, p["wk"], p["bk"]).reshape(num_head, B, S, Dh)
    V = lin(x, p["wv"], p["bv"]).reshape(num_head, B, S, Dh)
    s = jnp.einsum("hbqd,hbkd->hbqk", Q, K) / np.sqrt(Dh)
    s = jnp.where(pad_mask[None, :, None, :], -jnp.inf, s)
    pr = jax.nn.softmax(s, axis=-1)
    ctx = jnp.einsum("hbqk,hbkd->hbqd", pr, V).reshape(B, S, E)
    z = lin(ctx, p["wo"], p["bo"])

    def ln(t, g, b):
        mu = t.mean(-1, keepdims=True)
        var = ((t - mu) ** 2).mean(-1, keepdims=True)
        return (t - mu) / jnp.sqrt(var + EPS) * g + b

    h1 = ln(x + z, p["g1"], p["be1"])
    ff = jax.nn.gelu(lin(h1, p["w1"], p["b1"]), approximate=False)
    ff = lin(ff, p["w2"], p["b2"])
    return ln(h1 + ff, p["g2"], p["be2"])


# --------------------------------- main --------------------------------------

if __name__ == "__main__":
    B, S, E, H, FF = 2, 8, 32, 4, 64
    key = jax.random.PRNGKey(0)
    ks = jax.random.split(key, 20)
    sc = 0.1

    params = {
        # PyTorch nn.Linear weights are (out_features, in_features)
        "wq": jax.random.normal(ks[0], (E, E), jnp.float32) * sc,
        "bq": jax.random.normal(ks[1], (E,), jnp.float32) * sc,
        "wk": jax.random.normal(ks[2], (E, E), jnp.float32) * sc,
        "bk": jax.random.normal(ks[3], (E,), jnp.float32) * sc,
        "wv": jax.random.normal(ks[4], (E, E), jnp.float32) * sc,
        "bv": jax.random.normal(ks[5], (E,), jnp.float32) * sc,
        "wo": jax.random.normal(ks[6], (E, E), jnp.float32) * sc,
        "bo": jax.random.normal(ks[7], (E,), jnp.float32) * sc,
        "w1": jax.random.normal(ks[8], (FF, E), jnp.float32) * sc,
        "b1": jax.random.normal(ks[9], (FF,), jnp.float32) * sc,
        "w2": jax.random.normal(ks[10], (E, FF), jnp.float32) * sc,
        "b2": jax.random.normal(ks[11], (E,), jnp.float32) * sc,
        "g1": 1.0 + jax.random.normal(ks[12], (E,), jnp.float32) * sc,
        "be1": jax.random.normal(ks[13], (E,), jnp.float32) * sc,
        "g2": 1.0 + jax.random.normal(ks[14], (E,), jnp.float32) * sc,
        "be2": jax.random.normal(ks[15], (E,), jnp.float32) * sc,
    }

    x = jax.random.normal(ks[16], (B, S, E), jnp.float32)
    # True = padded key position (batch 0 unpadded, batch 1 has 3 padded tokens)
    lengths = jnp.array([S, S - 3])
    pad_mask = jnp.arange(S)[None, :] >= lengths[:, None]   # (B, S) bool

    pp = prepare_params(params)                 # one-time transpose hoist
    out = encoder_layer_pallas(x, pad_mask, pp, H)
    out = jax.block_until_ready(out)

    ref = encoder_layer_ref(x, pad_mask, params, H)
    assert out.shape == (B, S, E)
    err = np.max(np.abs(np.asarray(out) - np.asarray(ref)))
    assert np.allclose(np.asarray(out), np.asarray(ref), rtol=2e-4, atol=2e-4), err

    print("KERNEL_OK")
</pallas_src>

<mosaic_0001>
module attributes {stable_mosaic.version = 11 : i64} {
  func.func @_qkv_kernel(%arg0: i32, %arg1: memref<16x32xf32, #tpu.memory_space<vmem>>, %arg2: memref<32x32xf32, #tpu.memory_space<vmem>>, %arg3: memref<32x32xf32, #tpu.memory_space<vmem>>, %arg4: memref<32x32xf32, #tpu.memory_space<vmem>>, %arg5: memref<1x32xf32, #tpu.memory_space<vmem>>, %arg6: memref<1x32xf32, #tpu.memory_space<vmem>>, %arg7: memref<1x32xf32, #tpu.memory_space<vmem>>, %arg8: memref<16x32xf32, #tpu.memory_space<vmem>>, %arg9: memref<16x32xf32, #tpu.memory_space<vmem>>, %arg10: memref<16x32xf32, #tpu.memory_space<vmem>>) attributes {dimension_semantics = [#tpu.dimension_semantics<parallel>], iteration_bounds = array<i64: 1>, scalar_prefetch = 0 : i64, scratch_operands = 0 : i64, tpu.core_type = #tpu.core_type<tc>, window_params = [{transform_indices = @transform_0, window_bounds = array<i64: 16, 32>}, {pipeline_mode = #tpu.pipeline_mode<synchronous>, transform_indices = @transform_1, window_bounds = array<i64: 32, 32>}, {pipeline_mode = #tpu.pipeline_mode<synchronous>, transform_indices = @transform_2, window_bounds = array<i64: 32, 32>}, {pipeline_mode = #tpu.pipeline_mode<synchronous>, transform_indices = @transform_3, window_bounds = array<i64: 32, 32>}, {pipeline_mode = #tpu.pipeline_mode<synchronous>, transform_indices = @transform_4, window_bounds = array<i64: 1, 32>}, {pipeline_mode = #tpu.pipeline_mode<synchronous>, transform_indices = @transform_5, window_bounds = array<i64: 1, 32>}, {pipeline_mode = #tpu.pipeline_mode<synchronous>, transform_indices = @transform_6, window_bounds = array<i64: 1, 32>}, {transform_indices = @transform_7, window_bounds = array<i64: 16, 32>}, {transform_indices = @transform_8, window_bounds = array<i64: 16, 32>}, {transform_indices = @transform_9, window_bounds = array<i64: 16, 32>}]} {
    %c0 = arith.constant 0 : index
    %c0_0 = arith.constant 0 : index
    %0 = vector.load %arg1[%c0, %c0_0] : memref<16x32xf32, #tpu.memory_space<vmem>>, vector<16x32xf32>
    %c0_1 = arith.constant 0 : index
    %c0_2 = arith.constant 0 : index
    %1 = vector.load %arg2[%c0_1, %c0_2] : memref<32x32xf32, #tpu.memory_space<vmem>>, vector<32x32xf32>
    %cst = arith.constant dense<0.000000e+00> : vector<16x32xf32>
    %2 = tpu.matmul %0, %1, %cst {dimension_numbers = #tpu.dot_dimension_numbers<[1], [0], [0], [1], [0, 0, 1, 1], [], []>} : vector<16x32xf32>, vector<32x32xf32>, vector<16x32xf32> -> vector<16x32xf32>
    %c0_3 = arith.constant 0 : index
    %c0_4 = arith.constant 0 : index
    %3 = vector.load %arg5[%c0_3, %c0_4] : memref<1x32xf32, #tpu.memory_space<vmem>>, vector<1x32xf32>
    %4 = vector.broadcast %3 : vector<1x32xf32> to vector<16x32xf32>
    %5 = arith.addf %2, %4 : vector<16x32xf32>
    %c0_5 = arith.constant 0 : index
    %c0_6 = arith.constant 0 : index
    %6 = vector.load %arg8[%c0_5, %c0_6] : memref<16x32xf32, #tpu.memory_space<vmem>>, vector<16x32xf32>
    tpu.vector_store %arg8[%c0_5, %c0_6], %5 {strides = array<i32>} : memref<16x32xf32, #tpu.memory_space<vmem>>, vector<16x32xf32>,
    %c0_7 = arith.constant 0 : index
    %c0_8 = arith.constant 0 : index
    %7 = vector.load %arg3[%c0_7, %c0_8] : memref<32x32xf32, #tpu.memory_space<vmem>>, vector<32x32xf32>
    %cst_9 = arith.constant dense<0.000000e+00> : vector<16x32xf32>
    %8 = tpu.matmul %0, %7, %cst_9 {dimension_numbers = #tpu.dot_dimension_numbers<[1], [0], [0], [1], [0, 0, 1, 1], [], []>} : vector<16x32xf32>, vector<32x32xf32>, vector<16x32xf32> -> vector<16x32xf32>
    %c0_10 = arith.constant 0 : index
    %c0_11 = arith.constant 0 : index
    %9 = vector.load %arg6[%c0_10, %c0_11] : memref<1x32xf32, #tpu.memory_space<vmem>>, vector<1x32xf32>
    %10 = vector.broadcast %9 : vector<1x32xf32> to vector<16x32xf32>
    %11 = arith.addf %8, %10 : vector<16x32xf32>
    %c0_12 = arith.constant 0 : index
    %c0_13 = arith.constant 0 : index
    %12 = vector.load %arg9[%c0_12, %c0_13] : memref<16x32xf32, #tpu.memory_space<vmem>>, vector<16x32xf32>
    tpu.vector_store %arg9[%c0_12, %c0_13], %11 {strides = array<i32>} : memref<16x32xf32, #tpu.memory_space<vmem>>, vector<16x32xf32>,
    %c0_14 = arith.constant 0 : index
    %c0_15 = arith.constant 0 : index
    %13 = vector.load %arg4[%c0_14, %c0_15] : memref<32x32xf32, #tpu.memory_space<vmem>>, vector<32x32xf32>
    %cst_16 = arith.constant dense<0.000000e+00> : vector<16x32xf32>
    %14 = tpu.matmul %0, %13, %cst_16 {dimension_numbers = #tpu.dot_dimension_numbers<[1], [0], [0], [1], [0, 0, 1, 1], [], []>} : vector<16x32xf32>, vector<32x32xf32>, vector<16x32xf32> -> vector<16x32xf32>
    %c0_17 = arith.constant 0 : index
    %c0_18 = arith.constant 0 : index
    %15 = vector.load %arg7[%c0_17, %c0_18] : memref<1x32xf32, #tpu.memory_space<vmem>>, vector<1x32xf32>
    %16 = vector.broadcast %15 : vector<1x32xf32> to vector<16x32xf32>
    %17 = arith.addf %14, %16 : vector<16x32xf32>
    %c0_19 = arith.constant 0 : index
    %c0_20 = arith.constant 0 : index
    %18 = vector.load %arg10[%c0_19, %c0_20] : memref<16x32xf32, #tpu.memory_space<vmem>>, vector<16x32xf32>
    tpu.vector_store %arg10[%c0_19, %c0_20], %17 {strides = array<i32>} : memref<16x32xf32, #tpu.memory_space<vmem>>, vector<16x32xf32>,
    return
  }
  func.func @transform_0(%arg0: i32) -> (i32, i32) {
    %c0_i32 = arith.constant 0 : i32
    %c0_i32_0 = arith.constant 0 : i32
    return %arg0, %c0_i32 : i32, i32
  }
  func.func @transform_1(%arg0: i32) -> (i32, i32) {
    %c0_i32 = arith.constant 0 : i32
    %c0_i32_0 = arith.constant 0 : i32
    %c0_i32_1 = arith.constant 0 : i32
    return %c0_i32, %c0_i32_0 : i32, i32
  }
  func.func @transform_2(%arg0: i32) -> (i32, i32) {
    %c0_i32 = arith.constant 0 : i32
    %c0_i32_0 = arith.constant 0 : i32
    %c0_i32_1 = arith.constant 0 : i32
    return %c0_i32, %c0_i32_0 : i32, i32
  }
  func.func @transform_3(%arg0: i32) -> (i32, i32) {
    %c0_i32 = arith.constant 0 : i32
    %c0_i32_0 = arith.constant 0 : i32
    %c0_i32_1 = arith.constant 0 : i32
    return %c0_i32, %c0_i32_0 : i32, i32
  }
  func.func @transform_4(%arg0: i32) -> (i32, i32) {
    %c0_i32 = arith.constant 0 : i32
    %c0_i32_0 = arith.constant 0 : i32
    %c0_i32_1 = arith.constant 0 : i32
    return %c0_i32, %c0_i32_0 : i32, i32
  }
  func.func @transform_5(%arg0: i32) -> (i32, i32) {
    %c0_i32 = arith.constant 0 : i32
    %c0_i32_0 = arith.constant 0 : i32
    %c0_i32_1 = arith.constant 0 : i32
    return %c0_i32, %c0_i32_0 : i32, i32
  }
  func.func @transform_6(%arg0: i32) -> (i32, i32) {
    %c0_i32 = arith.constant 0 : i32
    %c0_i32_0 = arith.constant 0 : i32
    %c0_i32_1 = arith.constant 0 : i32
    return %c0_i32, %c0_i32_0 : i32, i32
  }
  func.func @transform_7(%arg0: i32) -> (i32, i32) {
    %c0_i32 = arith.constant 0 : i32
    %c0_i32_0 = arith.constant 0 : i32
    return %arg0, %c0_i32 : i32, i32
  }
  func.func @transform_8(%arg0: i32) -> (i32, i32) {
    %c0_i32 = arith.constant 0 : i32
    %c0_i32_0 = arith.constant 0 : i32
    return %arg0, %c0_i32 : i32, i32
  }
  func.func @transform_9(%arg0: i32) -> (i32, i32) {
    %c0_i32 = arith.constant 0 : i32
    %c0_i32_0 = arith.constant 0 : i32
    return %arg0, %c0_i32 : i32, i32
  }
}

module attributes {stable_mosaic.version = 11 : i64} {
  func.func @_attn_kernel(%arg0: i32, %arg1: memref<2x8x8xf32, #tpu.memory_space<vmem>>, %arg2: memref<2x8x8xf32, #tpu.memory_space<vmem>>, %arg3: memref<2x8x8xf32, #tpu.memory_space<vmem>>, %arg4: memref<2x8xf32, #tpu.memory_space<vmem>>, %arg5: memref<2x8x8xf32, #tpu.memory_space<vmem>>) attributes {dimension_semantics = [#tpu.dimension_semantics<parallel>], iteration_bounds = array<i64: 4>, scalar_prefetch = 0 : i64, scratch_operands = 0 : i64, tpu.core_type = #tpu.core_type<tc>, window_params = [{transform_indices = @transform_0, window_bounds = array<i64: 2, 8, 8>}, {transform_indices = @transform_1, window_bounds = array<i64: 2, 8, 8>}, {transform_indices = @transform_2, window_bounds = array<i64: 2, 8, 8>}, {pipeline_mode = #tpu.pipeline_mode<synchronous>, transform_indices = @transform_3, window_bounds = array<i64: 2, 8>}, {transform_indices = @transform_4, window_bounds = array<i64: 2, 8, 8>}]} {
    %c0 = arith.constant 0 : index
    %c0_0 = arith.constant 0 : index
    %c0_1 = arith.constant 0 : index
    %0 = vector.load %arg1[%c0, %c0_0, %c0_1] : memref<2x8x8xf32, #tpu.memory_space<vmem>>, vector<2x8x8xf32>
    %cst = arith.constant 0.353553385 : f32
    %1 = vector.broadcast %cst : f32 to vector<2x8x8xf32>
    %2 = arith.mulf %0, %1 : vector<2x8x8xf32>
    %c0_2 = arith.constant 0 : index
    %c0_3 = arith.constant 0 : index
    %c0_4 = arith.constant 0 : index
    %3 = vector.load %arg2[%c0_2, %c0_3, %c0_4] : memref<2x8x8xf32, #tpu.memory_space<vmem>>, vector<2x8x8xf32>
    %cst_5 = arith.constant dense<0.000000e+00> : vector<2x8x8xf32>
    %4 = tpu.matmul %2, %3, %cst_5 {dimension_numbers = #tpu.dot_dimension_numbers<[2], [2], [1], [1], [0, 0, 0, 1, 1, 1], [0], [0]>} : vector<2x8x8xf32>, vector<2x8x8xf32>, vector<2x8x8xf32> -> vector<2x8x8xf32>
    %c0_6 = arith.constant 0 : index
    %c0_7 = arith.constant 0 : index
    %5 = vector.load %arg4[%c0_6, %c0_7] : memref<2x8xf32, #tpu.memory_space<vmem>>, vector<2x8xf32>
    %6 = vector.shape_cast %5 : vector<2x8xf32> to vector<2x1x8xf32>
    %7 = vector.broadcast %6 : vector<2x1x8xf32> to vector<2x8x8xf32>
    %8 = arith.addf %4, %7 : vector<2x8x8xf32>
    %cst_8 = arith.constant dense<0xFF800000> : vector<2x8xf32>
    %9 = vector.multi_reduction <maximumf>, %8, %cst_8 [2] : vector<2x8x8xf32> to vector<2x8xf32>
    %10 = vector.shape_cast %9 : vector<2x8xf32> to vector<2x8x1xf32>
    %11 = vector.broadcast %10 : vector<2x8x1xf32> to vector<2x8x8xf32>
    %12 = arith.subf %8, %11 : vector<2x8x8xf32>
    %13 = math.exp %12 : vector<2x8x8xf32>
    %cst_9 = arith.constant dense<0.000000e+00> : vector<2x8xf32>
    %14 = vector.multi_reduction <add>, %13, %cst_9 [2] : vector<2x8x8xf32> to vector<2x8xf32>
    %15 = vector.shape_cast %14 : vector<2x8xf32> to vector<2x8x1xf32>
    %c0_10 = arith.constant 0 : index
    %c0_11 = arith.constant 0 : index
    %c0_12 = arith.constant 0 : index
    %16 = vector.load %arg3[%c0_10, %c0_11, %c0_12] : memref<2x8x8xf32, #tpu.memory_space<vmem>>, vector<2x8x8xf32>
    %cst_13 = arith.constant dense<0.000000e+00> : vector<2x8x8xf32>
    %17 = tpu.matmul %13, %16, %cst_13 {dimension_numbers = #tpu.dot_dimension_numbers<[2], [1], [1], [2], [0, 0, 0, 1, 1, 2], [0], [0]>} : vector<2x8x8xf32>, vector<2x8x8xf32>, vector<2x8x8xf32> -> vector<2x8x8xf32>
    %cst_14 = arith.constant 1.000000e+00 : f32
    %18 = vector.broadcast %cst_14 : f32 to vector<2x8x1xf32>
    %19 = arith.divf %18, %15 : vector<2x8x1xf32>
    %20 = vector.broadcast %19 : vector<2x8x1xf32> to vector<2x8x8xf32>
    %21 = arith.mulf %17, %20 : vector<2x8x8xf32>
    %c0_15 = arith.constant 0 : index
    %c0_16 = arith.constant 0 : index
    %c0_17 = arith.constant 0 : index
    %22 = vector.load %arg5[%c0_15, %c0_16, %c0_17] : memref<2x8x8xf32, #tpu.memory_space<vmem>>, vector<2x8x8xf32>
    tpu.vector_store %arg5[%c0_15, %c0_16, %c0_17], %21 {strides = array<i32>} : memref<2x8x8xf32, #tpu.memory_space<vmem>>, vector<2x8x8xf32>,
    return
  }
  func.func @transform_0(%arg0: i32) -> (i32, i32, i32) {
    %c0_i32 = arith.constant 0 : i32
    %c0_i32_0 = arith.constant 0 : i32
    %c0_i32_1 = arith.constant 0 : i32
    return %arg0, %c0_i32, %c0_i32_0 : i32, i32, i32
  }
  func.func @transform_1(%arg0: i32) -> (i32, i32, i32) {
    %c0_i32 = arith.constant 0 : i32
    %c0_i32_0 = arith.constant 0 : i32
    %c0_i32_1 = arith.constant 0 : i32
    return %arg0, %c0_i32, %c0_i32_0 : i32, i32, i32
  }
  func.func @transform_2(%arg0: i32) -> (i32, i32, i32) {
    %c0_i32 = arith.constant 0 : i32
    %c0_i32_0 = arith.constant 0 : i32
    %c0_i32_1 = arith.constant 0 : i32
    return %arg0, %c0_i32, %c0_i32_0 : i32, i32, i32
  }
  func.func @transform_3(%arg0: i32) -> (i32, i32) {
    %c0_i32 = arith.constant 0 : i32
    %c0_i32_0 = arith.constant 0 : i32
    %c0_i32_1 = arith.constant 0 : i32
    return %c0_i32, %c0_i32_0 : i32, i32
  }
  func.func @transform_4(%arg0: i32) -> (i32, i32, i32) {
    %c0_i32 = arith.constant 0 : i32
    %c0_i32_0 = arith.constant 0 : i32
    %c0_i32_1 = arith.constant 0 : i32
    return %arg0, %c0_i32, %c0_i32_0 : i32, i32, i32
  }
}

module attributes {stable_mosaic.version = 11 : i64} {
  func.func @_tail_kernel(%arg0: i32, %arg1: memref<16x32xf32, #tpu.memory_space<vmem>>, %arg2: memref<16x32xf32, #tpu.memory_space<vmem>>, %arg3: memref<32x32xf32, #tpu.memory_space<vmem>>, %arg4: memref<1x32xf32, #tpu.memory_space<vmem>>, %arg5: memref<32x64xf32, #tpu.memory_space<vmem>>, %arg6: memref<1x64xf32, #tpu.memory_space<vmem>>, %arg7: memref<64x32xf32, #tpu.memory_space<vmem>>, %arg8: memref<1x32xf32, #tpu.memory_space<vmem>>, %arg9: memref<1x32xf32, #tpu.memory_space<vmem>>, %arg10: memref<1x32xf32, #tpu.memory_space<vmem>>, %arg11: memref<1x32xf32, #tpu.memory_space<vmem>>, %arg12: memref<1x32xf32, #tpu.memory_space<vmem>>, %arg13: memref<16x32xf32, #tpu.memory_space<vmem>>) attributes {dimension_semantics = [#tpu.dimension_semantics<parallel>], iteration_bounds = array<i64: 1>, scalar_prefetch = 0 : i64, scratch_operands = 0 : i64, tpu.core_type = #tpu.core_type<tc>, window_params = [{transform_indices = @transform_0, window_bounds = array<i64: 16, 32>}, {transform_indices = @transform_1, window_bounds = array<i64: 16, 32>}, {pipeline_mode = #tpu.pipeline_mode<synchronous>, transform_indices = @transform_2, window_bounds = array<i64: 32, 32>}, {pipeline_mode = #tpu.pipeline_mode<synchronous>, transform_indices = @transform_3, window_bounds = array<i64: 1, 32>}, {pipeline_mode = #tpu.pipeline_mode<synchronous>, transform_indices = @transform_4, window_bounds = array<i64: 32, 64>}, {pipeline_mode = #tpu.pipeline_mode<synchronous>, transform_indices = @transform_5, window_bounds = array<i64: 1, 64>}, {pipeline_mode = #tpu.pipeline_mode<synchronous>, transform_indices = @transform_6, window_bounds = array<i64: 64, 32>}, {pipeline_mode = #tpu.pipeline_mode<synchronous>, transform_indices = @transform_7, window_bounds = array<i64: 1, 32>}, {pipeline_mode = #tpu.pipeline_mode<synchronous>, transform_indices = @transform_8, window_bounds = array<i64: 1, 32>}, {pipeline_mode = #tpu.pipeline_mode<synchronous>, transform_indices = @transform_9, window_bounds = array<i64: 1, 32>}, {pipeline_mode = #tpu.pipeline_mode<synchronous>, transform_indices = @transform_10, window_bounds = array<i64: 1, 32>}, {pipeline_mode = #tpu.pipeline_mode<synchronous>, transform_indices = @transform_11, window_bounds = array<i64: 1, 32>}, {transform_indices = @transform_12, window_bounds = array<i64: 16, 32>}]} {
    %c0 = arith.constant 0 : index
    %c0_0 = arith.constant 0 : index
    %0 = vector.load %arg2[%c0, %c0_0] : memref<16x32xf32, #tpu.memory_space<vmem>>, vector<16x32xf32>
    %c0_1 = arith.constant 0 : index
    %c0_2 = arith.constant 0 : index
    %1 = vector.load %arg1[%c0_1, %c0_2] : memref<16x32xf32, #tpu.memory_space<vmem>>, vector<16x32xf32>
    %c0_3 = arith.constant 0 : index
    %c0_4 = arith.constant 0 : index
    %2 = vector.load %arg3[%c0_3, %c0_4] : memref<32x32xf32, #tpu.memory_space<vmem>>, vector<32x32xf32>
    %cst = arith.constant dense<0.000000e+00> : vector<16x32xf32>
    %3 = tpu.matmul %1, %2, %cst {dimension_numbers = #tpu.dot_dimension_numbers<[1], [0], [0], [1], [0, 0, 1, 1], [], []>} : vector<16x32xf32>, vector<32x32xf32>, vector<16x32xf32> -> vector<16x32xf32>
    %c0_5 = arith.constant 0 : index
    %c0_6 = arith.constant 0 : index
    %4 = vector.load %arg4[%c0_5, %c0_6] : memref<1x32xf32, #tpu.memory_space<vmem>>, vector<1x32xf32>
    %5 = vector.broadcast %4 : vector<1x32xf32> to vector<16x32xf32>
    %6 = arith.addf %3, %5 : vector<16x32xf32>
    %7 = arith.addf %0, %6 : vector<16x32xf32>
    %c0_7 = arith.constant 0 : index
    %c0_8 = arith.constant 0 : index
    %8 = vector.load %arg9[%c0_7, %c0_8] : memref<1x32xf32, #tpu.memory_space<vmem>>, vector<1x32xf32>
    %c0_9 = arith.constant 0 : index
    %c0_10 = arith.constant 0 : index
    %9 = vector.load %arg10[%c0_9, %c0_10] : memref<1x32xf32, #tpu.memory_space<vmem>>, vector<1x32xf32>
    %cst_11 = arith.constant dense<0.000000e+00> : vector<16xf32>
    %10 = vector.multi_reduction <add>, %7, %cst_11 [1] : vector<16x32xf32> to vector<16xf32>
    %11 = vector.shape_cast %10 : vector<16xf32> to vector<16x1xf32>
    %cst_12 = arith.constant 3.200000e+01 : f32
    %12 = vector.broadcast %cst_12 : f32 to vector<16x1xf32>
    %13 = arith.divf %11, %12 : vector<16x1xf32>
    %14 = vector.broadcast %13 : vector<16x1xf32> to vector<16x32xf32>
    %15 = arith.subf %7, %14 : vector<16x32xf32>
    %16 = arith.mulf %15, %15 : vector<16x32xf32>
    %cst_13 = arith.constant dense<0.000000e+00> : vector<16xf32>
    %17 = vector.multi_reduction <add>, %16, %cst_13 [1] : vector<16x32xf32> to vector<16xf32>
    %18 = vector.shape_cast %17 : vector<16xf32> to vector<16x1xf32>
    %cst_14 = arith.constant 3.200000e+01 : f32
    %19 = vector.broadcast %cst_14 : f32 to vector<16x1xf32>
    %20 = arith.divf %18, %19 : vector<16x1xf32>
    %cst_15 = arith.constant 9.99999974E-6 : f32
    %21 = vector.broadcast %cst_15 : f32 to vector<16x1xf32>
    %22 = arith.addf %20, %21 : vector<16x1xf32>
    %23 = math.rsqrt %22 : vector<16x1xf32>
    %24 = vector.broadcast %23 : vector<16x1xf32> to vector<16x32xf32>
    %25 = arith.mulf %15, %24 : vector<16x32xf32>
    %26 = vector.broadcast %8 : vector<1x32xf32> to vector<16x32xf32>
    %27 = arith.mulf %25, %26 : vector<16x32xf32>
    %28 = vector.broadcast %9 : vector<1x32xf32> to vector<16x32xf32>
    %29 = arith.addf %27, %28 : vector<16x32xf32>
    %c0_16 = arith.constant 0 : index
    %c0_17 = arith.constant 0 : index
    %30 = vector.load %arg5[%c0_16, %c0_17] : memref<32x64xf32, #tpu.memory_space<vmem>>, vector<32x64xf32>
    %cst_18 = arith.constant dense<0.000000e+00> : vector<16x64xf32>
    %31 = tpu.matmul %29, %30, %cst_18 {dimension_numbers = #tpu.dot_dimension_numbers<[1], [0], [0], [1], [0, 0, 1, 1], [], []>} : vector<16x32xf32>, vector<32x64xf32>, vector<16x64xf32> -> vector<16x64xf32>
    %c0_19 = arith.constant 0 : index
    %c0_20 = arith.constant 0 : index
    %32 = vector.load %arg6[%c0_19, %c0_20] : memref<1x64xf32, #tpu.memory_space<vmem>>, vector<1x64xf32>
    %33 = vector.broadcast %32 : vector<1x64xf32> to vector<16x64xf32>
    %34 = arith.addf %31, %33 : vector<16x64xf32>
    %cst_21 = arith.constant 5.000000e-01 : f32
    %35 = vector.broadcast %cst_21 : f32 to vector<16x64xf32>
    %36 = arith.mulf %35, %34 : vector<16x64xf32>
    %cst_22 = arith.constant 0.707106769 : f32
    %37 = vector.broadcast %cst_22 : f32 to vector<16x64xf32>
    %38 = arith.mulf %34, %37 : vector<16x64xf32>
    %39 = math.erf %38 : vector<16x64xf32>
    %cst_23 = arith.constant 1.000000e+00 : f32
    %40 = vector.broadcast %cst_23 : f32 to vector<16x64xf32>
    %41 = arith.addf %40, %39 : vector<16x64xf32>
    %42 = arith.mulf %36, %41 : vector<16x64xf32>
    %c0_24 = arith.constant 0 : index
    %c0_25 = arith.constant 0 : index
    %43 = vector.load %arg7[%c0_24, %c0_25] : memref<64x32xf32, #tpu.memory_space<vmem>>, vector<64x32xf32>
    %cst_26 = arith.constant dense<0.000000e+00> : vector<16x32xf32>
    %44 = tpu.matmul %42, %43, %cst_26 {dimension_numbers = #tpu.dot_dimension_numbers<[1], [0], [0], [1], [0, 0, 1, 1], [], []>} : vector<16x64xf32>, vector<64x32xf32>, vector<16x32xf32> -> vector<16x32xf32>
    %c0_27 = arith.constant 0 : index
    %c0_28 = arith.constant 0 : index
    %45 = vector.load %arg8[%c0_27, %c0_28] : memref<1x32xf32, #tpu.memory_space<vmem>>, vector<1x32xf32>
    %46 = vector.broadcast %45 : vector<1x32xf32> to vector<16x32xf32>
    %47 = arith.addf %44, %46 : vector<16x32xf32>
    %48 = arith.addf %29, %47 : vector<16x32xf32>
    %c0_29 = arith.constant 0 : index
    %c0_30 = arith.constant 0 : index
    %49 = vector.load %arg11[%c0_29, %c0_30] : memref<1x32xf32, #tpu.memory_space<vmem>>, vector<1x32xf32>
    %c0_31 = arith.constant 0 : index
    %c0_32 = arith.constant 0 : index
    %50 = vector.load %arg12[%c0_31, %c0_32] : memref<1x32xf32, #tpu.memory_space<vmem>>, vector<1x32xf32>
    %cst_33 = arith.constant dense<0.000000e+00> : vector<16xf32>
    %51 = vector.multi_reduction <add>, %48, %cst_33 [1] : vector<16x32xf32> to vector<16xf32>
    %52 = vector.shape_cast %51 : vector<16xf32> to vector<16x1xf32>
    %cst_34 = arith.constant 3.200000e+01 : f32
    %53 = vector.broadcast %cst_34 : f32 to vector<16x1xf32>
    %54 = arith.divf %52, %53 : vector<16x1xf32>
    %55 = vector.broadcast %54 : vector<16x1xf32> to vector<16x32xf32>
    %56 = arith.subf %48, %55 : vector<16x32xf32>
    %57 = arith.mulf %56, %56 : vector<16x32xf32>
    %cst_35 = arith.constant dense<0.000000e+00> : vector<16xf32>
    %58 = vector.multi_reduction <add>, %57, %cst_35 [1] : vector<16x32xf32> to vector<16xf32>
    %59 = vector.shape_cast %58 : vector<16xf32> to vector<16x1xf32>
    %cst_36 = arith.constant 3.200000e+01 : f32
    %60 = vector.broadcast %cst_36 : f32 to vector<16x1xf32>
    %61 = arith.divf %59, %60 : vector<16x1xf32>
    %cst_37 = arith.constant 9.99999974E-6 : f32
    %62 = vector.broadcast %cst_37 : f32 to vector<16x1xf32>
    %63 = arith.addf %61, %62 : vector<16x1xf32>
    %64 = math.rsqrt %63 : vector<16x1xf32>
    %65 = vector.broadcast %64 : vector<16x1xf32> to vector<16x32xf32>
    %66 = arith.mulf %56, %65 : vector<16x32xf32>
    %67 = vector.broadcast %49 : vector<1x32xf32> to vector<16x32xf32>
    %68 = arith.mulf %66, %67 : vector<16x32xf32>
    %69 = vector.broadcast %50 : vector<1x32xf32> to vector<16x32xf32>
    %70 = arith.addf %68, %69 : vector<16x32xf32>
    %c0_38 = arith.constant 0 : index
    %c0_39 = arith.constant 0 : index
    %71 = vector.load %arg13[%c0_38, %c0_39] : memref<16x32xf32, #tpu.memory_space<vmem>>, vector<16x32xf32>
    tpu.vector_store %arg13[%c0_38, %c0_39], %70 {strides = array<i32>} : memref<16x32xf32, #tpu.memory_space<vmem>>, vector<16x32xf32>,
    return
  }
  func.func @transform_0(%arg0: i32) -> (i32, i32) {
    %c0_i32 = arith.constant 0 : i32
    %c0_i32_0 = arith.constant 0 : i32
    return %arg0, %c0_i32 : i32, i32
  }
  func.func @transform_1(%arg0: i32) -> (i32, i32) {
    %c0_i32 = arith.constant 0 : i32
    %c0_i32_0 = arith.constant 0 : i32
    return %arg0, %c0_i32 : i32, i32
  }
  func.func @transform_2(%arg0: i32) -> (i32, i32) {
    %c0_i32 = arith.constant 0 : i32
    %c0_i32_0 = arith.constant 0 : i32
    %c0_i32_1 = arith.constant 0 : i32
    return %c0_i32, %c0_i32_0 : i32, i32
  }
  func.func @transform_3(%arg0: i32) -> (i32, i32) {
    %c0_i32 = arith.constant 0 : i32
    %c0_i32_0 = arith.constant 0 : i32
    %c0_i32_1 = arith.constant 0 : i32
    return %c0_i32, %c0_i32_0 : i32, i32
  }
  func.func @transform_4(%arg0: i32) -> (i32, i32) {
    %c0_i32 = arith.constant 0 : i32
    %c0_i32_0 = arith.constant 0 : i32
    %c0_i32_1 = arith.constant 0 : i32
    return %c0_i32, %c0_i32_0 : i32, i32
  }
  func.func @transform_5(%arg0: i32) -> (i32, i32) {
    %c0_i32 = arith.constant 0 : i32
    %c0_i32_0 = arith.constant 0 : i32
    %c0_i32_1 = arith.constant 0 : i32
    return %c0_i32, %c0_i32_0 : i32, i32
  }
  func.func @transform_6(%arg0: i32) -> (i32, i32) {
    %c0_i32 = arith.constant 0 : i32
    %c0_i32_0 = arith.constant 0 : i32
    %c0_i32_1 = arith.constant 0 : i32
    return %c0_i32, %c0_i32_0 : i32, i32
  }
  func.func @transform_7(%arg0: i32) -> (i32, i32) {
    %c0_i32 = arith.constant 0 : i32
    %c0_i32_0 = arith.constant 0 : i32
    %c0_i32_1 = arith.constant 0 : i32
    return %c0_i32, %c0_i32_0 : i32, i32
  }
  func.func @transform_8(%arg0: i32) -> (i32, i32) {
    %c0_i32 = arith.constant 0 : i32
    %c0_i32_0 = arith.constant 0 : i32
    %c0_i32_1 = arith.constant 0 : i32
    return %c0_i32, %c0_i32_0 : i32, i32
  }
  func.func @transform_9(%arg0: i32) -> (i32, i32) {
    %c0_i32 = arith.constant 0 : i32
    %c0_i32_0 = arith.constant 0 : i32
    %c0_i32_1 = arith.constant 0 : i32
    return %c0_i32, %c0_i32_0 : i32, i32
  }
  func.func @transform_10(%arg0: i32) -> (i32, i32) {
    %c0_i32 = arith.constant 0 : i32
    %c0_i32_0 = arith.constant 0 : i32
    %c0_i32_1 = arith.constant 0 : i32
    return %c0_i32, %c0_i32_0 : i32, i32
  }
  func.func @transform_11(%arg0: i32) -> (i32, i32) {
    %c0_i32 = arith.constant 0 : i32
    %c0_i32_0 = arith.constant 0 : i32
    %c0_i32_1 = arith.constant 0 : i32
    return %c0_i32, %c0_i32_0 : i32, i32
  }
  func.func @transform_12(%arg0: i32) -> (i32, i32) {
    %c0_i32 = arith.constant 0 : i32
    %c0_i32_0 = arith.constant 0 : i32
    return %arg0, %c0_i32 : i32, i32
  }
}

</mosaic_0001>

<llo_original>
// kernel: encoder_layer_pallas.3
$region0: #{encoder_layer_pallas.3}
  #allocation0 [shape = 'u32[]', space=smem, size = 0x4, offset = 0x4, fixed_abs, tag = 'smem constant byte address 0x4 - core index']
  #allocation1 [shape = 'u32[144,128]{1,0:T(1,128)}', space=vmem, size = 0x12000, scoped, tag = 'internal scratch']
  %s0 = inlined_call_operand.hbm [shape: f32[16,32], index: 0, kind: input, shape index: {}]
  %s1 = inlined_call_operand.vmem [shape: f32[32,32], index: 1, kind: input, shape index: {}]
  %s2 = inlined_call_operand.vmem [shape: f32[32,32], index: 2, kind: input, shape index: {}]
  %s3 = inlined_call_operand.hbm [shape: f32[32,32], index: 3, kind: input, shape index: {}]
  %s4 = inlined_call_operand.hbm [shape: f32[1,32], index: 4, kind: input, shape index: {}]
  %s5 = inlined_call_operand.hbm [shape: f32[1,32], index: 5, kind: input, shape index: {}]
  %s6 = inlined_call_operand.hbm [shape: f32[1,32], index: 6, kind: input, shape index: {}]
  %s7 = inlined_call_operand.vmem [shape: f32[16,32], index: 7, kind: output, shape index: {0}]
  %s8 = inlined_call_operand.vmem [shape: f32[16,32], index: 8, kind: output, shape index: {1}]
  %s9 = inlined_call_operand.vmem [shape: f32[16,32], index: 9, kind: output, shape index: {2}]
  %10 = xla_tuple %s7, %s8, %s9
  %s11 = sld [smem:[#allocation0]]
  $region74: #{encoder_layer_pallas.3} parent=0
    _
  %s13 = ssub.s32 1, %s11
  %s14 = scalar_select 0, %s13, %s11
  $region1: #{encoder_layer_pallas.3} parent=0
    #allocation2 [shape = 'u8[8192]{0}', space=vmem, size = 0x2000, scoped, tag = 'input window, operand 0, single buffered']
    #allocation3 [shape = 's32[1]{0}', space=sflag, size = 0x4, scoped, tag = 'scoped memory for encoder_layer_pallas.3']
    #allocation4 [shape = 'u8[16384]{0}', space=vmem, size = 0x4000, scoped, tag = 'input window, operand 3, single buffered']
    #allocation5 [shape = 's32[1]{0}', space=sflag, size = 0x4, scoped, tag = 'scoped memory for encoder_layer_pallas.3']
    #allocation6 [shape = 'u8[512]{0}', space=vmem, size = 0x400, scoped, tag = 'input window, operand 4, single buffered']
    #allocation7 [shape = 'u8[512]{0}', space=vmem, size = 0x400, scoped, tag = 'input window, operand 5, single buffered']
    #allocation8 [shape = 's32[1]{0}', space=sflag, size = 0x4, scoped, tag = 'scoped memory for encoder_layer_pallas.3']
    #allocation9 [shape = 'u8[512]{0}', space=vmem, size = 0x400, scoped, tag = 'input window, operand 6, single buffered']
    %15 = vsyncpa [#allocation3], 0
    %16 = vsyncpa [#allocation5], 0
    %17 = vsyncpa [#allocation8], 0
    // Predicated region
    $region2: #{encoder_layer_pallas.3} parent=1 // pred_check
      _
    $region3: #{encoder_layer_pallas.3} parent=1 // pred_check_branch
      %19 = sbr.rel (0) target = $region5
    $region4: #{encoder_layer_pallas.3} parent=1 // pred_region
      %s21 = ssub.s32 256, 256
      %22 = vsyncadd [#allocation3], %s21
      %s23 = sshll.u32 [#allocation2], 4
      %s24 = int_to_ptr.vmem [resolvable:$true] %s23
      %29 = dma.hbm_to_vmem [thread:$0]  %s0, 256, %s24, [#allocation3], 128, 128, 8
    $region5: #{encoder_layer_pallas.3} parent=1 // pred_fallthru
      _
    // Predicated region
    $region6: #{encoder_layer_pallas.3} parent=1 // pred_check
      _
    $region7: #{encoder_layer_pallas.3} parent=1 // pred_check_branch
      %31 = sbr.rel (0) target = $region9
    $region8: #{encoder_layer_pallas.3} parent=1 // pred_region
      _
    $region9: #{encoder_layer_pallas.3} parent=1 // pred_fallthru
      _
    // Predicated region
    $region10: #{encoder_layer_pallas.3} parent=1 // pred_check
      _
    $region11: #{encoder_layer_pallas.3} parent=1 // pred_check_branch
      %33 = sbr.rel (0) target = $region13
    $region12: #{encoder_layer_pallas.3} parent=1 // pred_region
      _
    $region13: #{encoder_layer_pallas.3} parent=1 // pred_fallthru
      _
    // Predicated region
    $region14: #{encoder_layer_pallas.3} parent=1 // pred_check
      _
    $region15: #{encoder_layer_pallas.3} parent=1 // pred_check_branch
      %35 = sbr.rel (0) target = $region17
    $region16: #{encoder_layer_pallas.3} parent=1 // pred_region
      %s37 = ssub.s32 512, 512
      %38 = vsyncadd [#allocation5], %s37
      %s39 = sshll.u32 [#allocation4], 4
      %s40 = int_to_ptr.vmem [resolvable:$true] %s39
      %45 = dma.hbm_to_vmem [thread:$0]  %s3, 512, %s40, [#allocation5], 128, 128, 8
    $region17: #{encoder_layer_pallas.3} parent=1 // pred_fallthru
      _
    // Predicated region
    $region18: #{encoder_layer_pallas.3} parent=1 // pred_check
      _
    $region19: #{encoder_layer_pallas.3} parent=1 // pred_check_branch
      %47 = sbr.rel (0) target = $region21
    $region20: #{encoder_layer_pallas.3} parent=1 // pred_region
      %s49 = ssub.s32 16, 16
      %50 = vsyncadd [#allocation5], %s49
      %s52 = sshll.u32 [#allocation6], 4
      %s53 = int_to_ptr.vmem [resolvable:$true] %s52
      %55 = dma.hbm_to_vmem [thread:$0]  %s4, 16, %s53, [#allocation5]
    $region21: #{encoder_layer_pallas.3} parent=1 // pred_fallthru
      _
    // Predicated region
    $region22: #{encoder_layer_pallas.3} parent=1 // pred_check
      _
    $region23: #{encoder_layer_pallas.3} parent=1 // pred_check_branch
      %57 = sbr.rel (0) target = $region25
    $region24: #{encoder_layer_pallas.3} parent=1 // pred_region
      %s59 = ssub.s32 16, 16
      %60 = vsyncadd [#allocation8], %s59
      %s62 = sshll.u32 [#allocation7], 4
      %s63 = int_to_ptr.vmem [resolvable:$true] %s62
      %65 = dma.hbm_to_vmem [thread:$0]  %s5, 16, %s63, [#allocation8]
    $region25: #{encoder_layer_pallas.3} parent=1 // pred_fallthru
      _
    // Predicated region
    $region26: #{encoder_layer_pallas.3} parent=1 // pred_check
      _
    $region27: #{encoder_layer_pallas.3} parent=1 // pred_check_branch
      %67 = sbr.rel (0) target = $region29
    $region28: #{encoder_layer_pallas.3} parent=1 // pred_region
      %s69 = ssub.s32 16, 16
      %70 = vsyncadd [#allocation8], %s69
      %s72 = sshll.u32 [#allocation9], 4
      %s73 = int_to_ptr.vmem [resolvable:$true] %s72
      %75 = dma.hbm_to_vmem [thread:$0]  %s6, 16, %s73, [#allocation8]
    $region29: #{encoder_layer_pallas.3} parent=1 // pred_fallthru
      _
    // Predicated region
    $region30: #{encoder_layer_pallas.3} parent=1 // pred_check
      _
    $region31: #{encoder_layer_pallas.3} parent=1 // pred_check_branch
      %77 = sbr.rel (0) target = $region33
    $region32: #{encoder_layer_pallas.3} parent=1 // pred_region
      %78 = dma.done [#allocation3], 256
    $region33: #{encoder_layer_pallas.3} parent=1 // pred_fallthru
      _
    // Predicated region
    $region34: #{encoder_layer_pallas.3} parent=1 // pred_check
      _
    $region35: #{encoder_layer_pallas.3} parent=1 // pred_check_branch
      %80 = sbr.rel (0) target = $region37
    $region36: #{encoder_layer_pallas.3} parent=1 // pred_region
      %81 = dma.done [#allocation5], 512
    $region37: #{encoder_layer_pallas.3} parent=1 // pred_fallthru
      _
    // Predicated region
    $region38: #{encoder_layer_pallas.3} parent=1 // pred_check
      _
    $region39: #{encoder_layer_pallas.3} parent=1 // pred_check_branch
      %83 = sbr.rel (0) target = $region41
    $region40: #{encoder_layer_pallas.3} parent=1 // pred_region
      %84 = dma.done [#allocation5], 16
    $region41: #{encoder_layer_pallas.3} parent=1 // pred_fallthru
      _
    // Predicated region
    $region42: #{encoder_layer_pallas.3} parent=1 // pred_check
      _
    $region43: #{encoder_layer_pallas.3} parent=1 // pred_check_branch
      %86 = sbr.rel (0) target = $region45
    $region44: #{encoder_layer_pallas.3} parent=1 // pred_region
      %87 = dma.done [#allocation8], 16
    $region45: #{encoder_layer_pallas.3} parent=1 // pred_fallthru
      _
    // Predicated region
    $region46: #{encoder_layer_pallas.3} parent=1 // pred_check
      _
    $region47: #{encoder_layer_pallas.3} parent=1 // pred_check_branch
      %89 = sbr.rel (0) target = $region49
    $region48: #{encoder_layer_pallas.3} parent=1 // pred_region
      %90 = dma.done [#allocation8], 16
    $region49: #{encoder_layer_pallas.3} parent=1 // pred_fallthru
      _
    %v91 = vld [vmem:[#allocation2] sm:$0xff]
    %v92 = vld [vmem:[#allocation2 + $0x8] sm:$0xff]
    %v93 = vld [vmem:[%s1] sm:$0xff]
    %v94 = vld [vmem:[%s1 + $0x8] sm:$0xff]
    %v95 = vld [vmem:[%s1 + $0x10] sm:$0xff]
    %v96 = vld [vmem:[%s1 + $0x18] sm:$0xff]
    %v97 = vld [vmem:[#allocation6] sm:$0x1]
    %v99 = vlaneseq
    %v100 = vshrl.u32 %v99, 7
    %v101 = vsub.s32 0, %v100
    %v102 = vrot.slane %v97, %v101
    %vm104 = vcmask 261120
    %v106 = vsel %vm104, %v91, 0
    %v109 = vsel %vm104, %v92, 0
    %111 = vmatprep.subr.mxu0 0.0
    %112 = vmatpush1.msra.mxu0 %v93
    %113 = vmatprep.subr.mxu0 0.0
    %114 = vmatpush1.msra.mxu0 %v94
    %115 = vmatprep.subr.mxu0 0.0
    %116 = vmatpush1.msra.mxu0 %v95
    %117 = vmatprep.subr.mxu0 0.0
    %118 = vmatpush1.msra.mxu0 %v96
    %119 = vmatprep.subr.mxu0 0.0
    %120 = vmatpush1.msra.mxu0 0.0
    %121 = vmatprep.subr.mxu0 0.0
    %122 = vmatpush1.msra.mxu0 0.0
    %123 = vmatprep.subr.mxu0 0.0
    %124 = vmatpush1.msra.mxu0 0.0
    %125 = vmatprep.subr.mxu0 0.0
    %126 = vmatpush1.msra.mxu0 0.0
    %127 = vmatprep.subr.mxu0 0.0
    %128 = vmatpush1.msra.mxu0 0.0
    %129 = vmatprep.subr.mxu0 0.0
    %130 = vmatpush1.msra.mxu0 0.0
    %131 = vmatprep.subr.mxu0 0.0
    %132 = vmatpush1.msra.mxu0 0.0
    %133 = vmatprep.subr.mxu0 0.0
    %134 = vmatpush1.msra.mxu0 0.0
    %135 = vmatprep.subr.mxu0 0.0
    %136 = vmatpush1.msra.mxu0 0.0
    %137 = vmatprep.subr.mxu0 0.0
    %138 = vmatpush1.msra.mxu0 0.0
    %139 = vmatprep.subr.mxu0 0.0
    %140 = vmatpush1.msra.mxu0 0.0
    %141 = vmatprep.subr.mxu0 0.0
    %142 = vmatpush1.msra.mxu0 0.0
    %143 = vmatprep.subr.mxu0 0.0
    %144 = vmatpush1.msra.mxu0 0.0
    %145 = vmatprep.subr.mxu0 0.0
    %146 = vmatpush1.msra.mxu0 0.0
    %147 = vmatprep.subr.mxu0 0.0
    %148 = vmatpush1.msra.mxu0 0.0
    %149 = vmatprep.subr.mxu0 0.0
    %150 = vmatpush1.msra.mxu0 0.0
    %151 = vmatprep.subr.mxu0 0.0
    %152 = vmatpush1.msra.mxu0 0.0
    %153 = vmatprep.subr.mxu0 0.0
    %154 = vmatpush1.msra.mxu0 0.0
    %155 = vmatprep.subr.mxu0 0.0
    %156 = vmatpush1.msra.mxu0 0.0
    %157 = vmatprep.subr.mxu0 0.0
    %158 = vmatpush1.msra.mxu0 0.0
    %159 = vmatprep.subr.mxu0 0.0
    %160 = vmatpush1.msra.mxu0 0.0
    %161 = vmatprep.subr.mxu0 0.0
    %162 = vmatpush1.msra.mxu0 0.0
    %163 = vmatprep.subr.mxu0 0.0
    %164 = vmatpush1.msra.mxu0 0.0
    %165 = vmatprep.subr.mxu0 0.0
    %166 = vmatpush1.msra.mxu0 0.0
    %167 = vmatprep.subr.mxu0 0.0
    %168 = vmatpush1.msra.mxu0 0.0
    %169 = vmatprep.subr.mxu0 0.0
    %170 = vmatpush1.msra.mxu0 0.0
    %171 = vmatprep.subr.mxu0 0.0
    %172 = vmatpush1.msra.mxu0 0.0
    %173 = vmatprep.subr.mxu0 0.0
    %174 = vmatpush1.msra.mxu0 0.0
    %175 = vmatprep.mubr.f32.mxu0 0.0
    %176 = vmatmul.mubr.f32.gmra.mrb[0].mxu0 %v106
    %v177 = vpop.f32.mrb[0].mxu0
    %v178 = vadd.f32 %v102, %v177
    %v179 = vpop.f32.mrb[0].mxu0
    %180 = vmatprep.mubr.f32.mxu0 0.0
    %181 = vmatmul.mubr.f32.gmra.mrb[0].mxu0 %v109
    %v182 = vpop.f32.mrb[0].mxu0
    %v183 = vadd.f32 %v102, %v182
    %v184 = vpop.f32.mrb[0].mxu0
    %185 = vdwg.mxu0
    %186 = vst.msk [vmem:[%s7] sm:$0xff] %vm104, %v178
    %187 = vst.msk [vmem:[%s7 + $0x8] sm:$0xff] %vm104, %v183
    %v188 = vld [vmem:[%s2] sm:$0xff]
    %v189 = vld [vmem:[%s2 + $0x8] sm:$0xff]
    %v190 = vld [vmem:[%s2 + $0x10] sm:$0xff]
    %v191 = vld [vmem:[%s2 + $0x18] sm:$0xff]
    %v192 = vld [vmem:[#allocation7] sm:$0x1]
    %v194 = vlaneseq
    %v195 = vshrl.u32 %v194, 7
    %v196 = vsub.s32 0, %v195
    %v197 = vrot.slane %v192, %v196
    %199 = vmatprep.subr.mxu0 0.0
    %200 = vmatpush1.msra.mxu0 %v188
    %201 = vmatprep.subr.mxu0 0.0
    %202 = vmatpush1.msra.mxu0 %v189
    %203 = vmatprep.subr.mxu0 0.0
    %204 = vmatpush1.msra.mxu0 %v190
    %205 = vmatprep.subr.mxu0 0.0
    %206 = vmatpush1.msra.mxu0 %v191
    %207 = vmatprep.subr.mxu0 0.0
    %208 = vmatpush1.msra.mxu0 0.0
    %209 = vmatprep.subr.mxu0 0.0
    %210 = vmatpush1.msra.mxu0 0.0
    %211 = vmatprep.subr.mxu0 0.0
    %212 = vmatpush1.msra.mxu0 0.0
    %213 = vmatprep.subr.mxu0 0.0
    %214 = vmatpush1.msra.mxu0 0.0
    %215 = vmatprep.subr.mxu0 0.0
    %216 = vmatpush1.msra.mxu0 0.0
    %217 = vmatprep.subr.mxu0 0.0
    %218 = vmatpush1.msra.mxu0 0.0
    %219 = vmatprep.subr.mxu0 0.0
    %220 = vmatpush1.msra.mxu0 0.0
    %221 = vmatprep.subr.mxu0 0.0
    %222 = vmatpush1.msra.mxu0 0.0
    %223 = vmatprep.subr.mxu0 0.0
    %224 = vmatpush1.msra.mxu0 0.0
    %225 = vmatprep.subr.mxu0 0.0
    %226 = vmatpush1.msra.mxu0 0.0
    %227 = vmatprep.subr.mxu0 0.0
    %228 = vmatpush1.msra.mxu0 0.0
    %229 = vmatprep.subr.mxu0 0.0
    %230 = vmatpush1.msra.mxu0 0.0
    %231 = vmatprep.subr.mxu0 0.0
    %232 = vmatpush1.msra.mxu0 0.0
    %233 = vmatprep.subr.mxu0 0.0
    %234 = vmatpush1.msra.mxu0 0.0
    %235 = vmatprep.subr.mxu0 0.0
    %236 = vmatpush1.msra.mxu0 0.0
    %237 = vmatprep.subr.mxu0 0.0
    %238 = vmatpush1.msra.mxu0 0.0
    %239 = vmatprep.subr.mxu0 0.0
    %240 = vmatpush1.msra.mxu0 0.0
    %241 = vmatprep.subr.mxu0 0.0
    %242 = vmatpush1.msra.mxu0 0.0
    %243 = vmatprep.subr.mxu0 0.0
    %244 = vmatpush1.msra.mxu0 0.0
    %245 = vmatprep.subr.mxu0 0.0
    %246 = vmatpush1.msra.mxu0 0.0
    %247 = vmatprep.subr.mxu0 0.0
    %248 = vmatpush1.msra.mxu0 0.0
    %249 = vmatprep.subr.mxu0 0.0
    %250 = vmatpush1.msra.mxu0 0.0
    %251 = vmatprep.subr.mxu0 0.0
    %252 = vmatpush1.msra.mxu0 0.0
    %253 = vmatprep.subr.mxu0 0.0
    %254 = vmatpush1.msra.mxu0 0.0
    %255 = vmatprep.subr.mxu0 0.0
    %256 = vmatpush1.msra.mxu0 0.0
    %257 = vmatprep.subr.mxu0 0.0
    %258 = vmatpush1.msra.mxu0 0.0
    %259 = vmatprep.subr.mxu0 0.0
    %260 = vmatpush1.msra.mxu0 0.0
    %261 = vmatprep.subr.mxu0 0.0
    %262 = vmatpush1.msra.mxu0 0.0
    %263 = vmatprep.mubr.f32.mxu0 0.0
    %264 = vmatmul.mubr.f32.gmra.mrb[0].mxu0 %v106
    %v265 = vpop.f32.mrb[0].mxu0
    %v266 = vadd.f32 %v197, %v265
    %v267 = vpop.f32.mrb[0].mxu0
    %268 = vmatprep.mubr.f32.mxu0 0.0
    %269 = vmatmul.mubr.f32.gmra.mrb[0].mxu0 %v109
    %v270 = vpop.f32.mrb[0].mxu0
    %v271 = vadd.f32 %v197, %v270
    %v272 = vpop.f32.mrb[0].mxu0
    %273 = vdwg.mxu0
    %274 = vst.msk [vmem:[%s8] sm:$0xff] %vm104, %v266
    %275 = vst.msk [vmem:[%s8 + $0x8] sm:$0xff] %vm104, %v271
    %v276 = vld [vmem:[#allocation4] sm:$0xff]
    %v277 = vld [vmem:[#allocation4 + $0x8] sm:$0xff]
    %v278 = vld [vmem:[#allocation4 + $0x10] sm:$0xff]
    %v279 = vld [vmem:[#allocation4 + $0x18] sm:$0xff]
    %v280 = vld [vmem:[#allocation9] sm:$0x1]
    %v282 = vlaneseq
    %v283 = vshrl.u32 %v282, 7
    %v284 = vsub.s32 0, %v283
    %v285 = vrot.slane %v280, %v284
    %287 = vmatprep.subr.mxu0 0.0
    %288 = vmatpush1.msra.mxu0 %v276
    %289 = vmatprep.subr.mxu0 0.0
    %290 = vmatpush1.msra.mxu0 %v277
    %291 = vmatprep.subr.mxu0 0.0
    %292 = vmatpush1.msra.mxu0 %v278
    %293 = vmatprep.subr.mxu0 0.0
    %294 = vmatpush1.msra.mxu0 %v279
    %295 = vmatprep.subr.mxu0 0.0
    %296 = vmatpush1.msra.mxu0 0.0
    %297 = vmatprep.subr.mxu0 0.0
    %298 = vmatpush1.msra.mxu0 0.0
    %299 = vmatprep.subr.mxu0 0.0
    %300 = vmatpush1.msra.mxu0 0.0
    %301 = vmatprep.subr.mxu0 0.0
    %302 = vmatpush1.msra.mxu0 0.0
    %303 = vmatprep.subr.mxu0 0.0
    %304 = vmatpush1.msra.mxu0 0.0
    %305 = vmatprep.subr.mxu0 0.0
    %306 = vmatpush1.msra.mxu0 0.0
    %307 = vmatprep.subr.mxu0 0.0
    %308 = vmatpush1.msra.mxu0 0.0
    %309 = vmatprep.subr.mxu0 0.0
    %310 = vmatpush1.msra.mxu0 0.0
    %311 = vmatprep.subr.mxu0 0.0
    %312 = vmatpush1.msra.mxu0 0.0
    %313 = vmatprep.subr.mxu0 0.0
    %314 = vmatpush1.msra.mxu0 0.0
    %315 = vmatprep.subr.mxu0 0.0
    %316 = vmatpush1.msra.mxu0 0.0
    %317 = vmatprep.subr.mxu0 0.0
    %318 = vmatpush1.msra.mxu0 0.0
    %319 = vmatprep.subr.mxu0 0.0
    %320 = vmatpush1.msra.mxu0 0.0
    %321 = vmatprep.subr.mxu0 0.0
    %322 = vmatpush1.msra.mxu0 0.0
    %323 = vmatprep.subr.mxu0 0.0
    %324 = vmatpush1.msra.mxu0 0.0
    %325 = vmatprep.subr.mxu0 0.0
    %326 = vmatpush1.msra.mxu0 0.0
    %327 = vmatprep.subr.mxu0 0.0
    %328 = vmatpush1.msra.mxu0 0.0
    %329 = vmatprep.subr.mxu0 0.0
    %330 = vmatpush1.msra.mxu0 0.0
    %331 = vmatprep.subr.mxu0 0.0
    %332 = vmatpush1.msra.mxu0 0.0
    %333 = vmatprep.subr.mxu0 0.0
    %334 = vmatpush1.msra.mxu0 0.0
    %335 = vmatprep.subr.mxu0 0.0
    %336 = vmatpush1.msra.mxu0 0.0
    %337 = vmatprep.subr.mxu0 0.0
    %338 = vmatpush1.msra.mxu0 0.0
    %339 = vmatprep.subr.mxu0 0.0
    %340 = vmatpush1.msra.mxu0 0.0
    %341 = vmatprep.subr.mxu0 0.0
    %342 = vmatpush1.msra.mxu0 0.0
    %343 = vmatprep.subr.mxu0 0.0
    %344 = vmatpush1.msra.mxu0 0.0
    %345 = vmatprep.subr.mxu0 0.0
    %346 = vmatpush1.msra.mxu0 0.0
    %347 = vmatprep.subr.mxu0 0.0
    %348 = vmatpush1.msra.mxu0 0.0
    %349 = vmatprep.subr.mxu0 0.0
    %350 = vmatpush1.msra.mxu0 0.0
    %351 = vmatprep.mubr.f32.mxu0 0.0
    %352 = vmatmul.mubr.f32.gmra.mrb[0].mxu0 %v106
    %v353 = vpop.f32.mrb[0].mxu0
    %v354 = vadd.f32 %v285, %v353
    %v355 = vpop.f32.mrb[0].mxu0
    %356 = vmatprep.mubr.f32.mxu0 0.0
    %357 = vmatmul.mubr.f32.gmra.mrb[0].mxu0 %v109
    %v358 = vpop.f32.mrb[0].mxu0
    %v359 = vadd.f32 %v285, %v358
    %v360 = vpop.f32.mrb[0].mxu0
    %361 = vdwg.mxu0
    %362 = vst.msk [vmem:[%s9] sm:$0xff] %vm104, %v354
    %363 = vst.msk [vmem:[%s9 + $0x8] sm:$0xff] %vm104, %v359
    // Predicated region
    $region50: #{encoder_layer_pallas.3} parent=1 // pred_check
      _
    $region51: #{encoder_layer_pallas.3} parent=1 // pred_check_branch
      %365 = sbr.rel (0) target = $region53
    $region52: #{encoder_layer_pallas.3} parent=1 // pred_region
      _
    $region53: #{encoder_layer_pallas.3} parent=1 // pred_fallthru
      _
    // Predicated region
    $region54: #{encoder_layer_pallas.3} parent=1 // pred_check
      _
    $region55: #{encoder_layer_pallas.3} parent=1 // pred_check_branch
      %367 = sbr.rel (0) target = $region57
    $region56: #{encoder_layer_pallas.3} parent=1 // pred_region
      _
    $region57: #{encoder_layer_pallas.3} parent=1 // pred_fallthru
      _
    // Predicated region
    $region58: #{encoder_layer_pallas.3} parent=1 // pred_check
      _
    $region59: #{encoder_layer_pallas.3} parent=1 // pred_check_branch
      %369 = sbr.rel (0) target = $region61
    $region60: #{encoder_layer_pallas.3} parent=1 // pred_region
      _
    $region61: #{encoder_layer_pallas.3} parent=1 // pred_fallthru
      _
    // Predicated region
    $region62: #{encoder_layer_pallas.3} parent=1 // pred_check
      _
    $region63: #{encoder_layer_pallas.3} parent=1 // pred_check_branch
      %371 = sbr.rel (0) target = $region65
    $region64: #{encoder_layer_pallas.3} parent=1 // pred_region
      _
    $region65: #{encoder_layer_pallas.3} parent=1 // pred_fallthru
      _
    // Predicated region
    $region66: #{encoder_layer_pallas.3} parent=1 // pred_check
      _
    $region67: #{encoder_layer_pallas.3} parent=1 // pred_check_branch
      %373 = sbr.rel (0) target = $region69
    $region68: #{encoder_layer_pallas.3} parent=1 // pred_region
      _
    $region69: #{encoder_layer_pallas.3} parent=1 // pred_fallthru
      _
    // Predicated region
    $region70: #{encoder_layer_pallas.3} parent=1 // pred_check
      _
    $region71: #{encoder_layer_pallas.3} parent=1 // pred_check_branch
      %375 = sbr.rel (0) target = $region73
    $region72: #{encoder_layer_pallas.3} parent=1 // pred_region
      _
    $region73: #{encoder_layer_pallas.3} parent=1 // pred_fallthru
      _
    %376 = vsyncpa [#allocation3], 1
    %377 = vsyncpa [#allocation5], 1
    %378 = vsyncpa [#allocation8], 1

// kernel: encoder_layer_pallas.4
$region0: #{encoder_layer_pallas.4}
  #allocation0 [shape = 'u32[]', space=smem, size = 0x4, offset = 0x4, fixed_abs, tag = 'smem constant byte address 0x4 - core index']
  #allocation1 [shape = 'u32[144,128]{1,0:T(1,128)}', space=vmem, size = 0x12000, scoped, tag = 'internal scratch']
  %s0 = inlined_call_operand.vmem [shape: f32[8,8,8], index: 0, kind: input, shape index: {}]
  %s1 = inlined_call_operand.vmem [shape: f32[8,8,8], index: 1, kind: input, shape index: {}]
  %s2 = inlined_call_operand.vmem [shape: f32[8,8,8], index: 2, kind: input, shape index: {}]
  %s3 = inlined_call_operand.vmem [shape: f32[2,8], index: 3, kind: input, shape index: {}]
  %s4 = inlined_call_operand.vmem [shape: f32[8,8,8], index: 4, kind: output, shape index: {}]
  %s5 = sld [smem:[#allocation0]]
  $region49: #{encoder_layer_pallas.4} parent=0
    _
  %s7 = ssub.s32 1, %s5
  %s8 = scalar_select 0, %s7, %s5
  loop: start=0, step=1, limit=6
  $region2: #{encoder_layer_pallas.4} parent=0 // loop_pre_header
    _
  $region3: #{encoder_layer_pallas.4} parent=0 // loop_header
    %s10 = sphi 0, %s14
    %p11 = scmp.ge.s32.totalorder %s10, 6
    %s20 = sphi 0, %s22
    %s23 = sphi 0, %s20
    %s24 = sphi 0, %s23
    %s40 = sphi 0, %s24
    %s46 = sphi 0, %s48
    %s49 = sphi 0, %s46
    %s50 = sphi 0, %s49
    %s66 = sphi 0, %s50
    %s72 = sphi 0, %s74
    %s75 = sphi 0, %s72
    %s76 = sphi 0, %s75
    %s92 = sphi 0, %s76
    %s96 = sphi 0, %s96
    %s98 = sphi 0, %s96
    %s99 = sphi 0, %s98
    %s113 = sphi 0, %s99
    %s119 = sphi 0, %s121
    %s122 = sphi 0, %s119
    %s123 = sphi 0, %s122
    %s139 = sphi 0, %s123
  $region4: #{encoder_layer_pallas.4} parent=0 // loop_header_branch
    %13 = sbr.rel (%p11) target = $region8
  $region5: #{encoder_layer_pallas.4} parent=0 // loop_body
    %s15 = ssub.s32 %s10, 1
    %s16 = ssub.s32 %s10, 2
    %s17 = sadd.s32 %s10, 1
    %s18 = ssub.s32 %s10, %s17
    %p19 = scmp.eq.s32.totalorder %s18, 0
    %s21 = sadd.s32 %s20, 1
    %s22 = scalar_select %p19, %s20, %s21
    %p25 = pneg %p19
    %p26 = scmp.eq.s32.totalorder %s10, 3
    %p27 = por %p25, %p26
    %p28 = scmp.ne.s32.totalorder %s20, %s23
    %p29 = scmp.eq.s32.totalorder %s10, 0
    %p30 = por %p28, %p29
    %p31 = scmp.ne.s32.totalorder %s20, %s23
    %p32 = scmp.eq.s32.totalorder %s15, 3
    %p33 = por %p31, %p32
    %p34 = scmp.ne.s32.totalorder %s23, %s24
    %p35 = scmp.eq.s32.totalorder %s15, 0
    %p36 = por %p34, %p35
    %p37 = scmp.ne.s32.totalorder %s23, %s24
    %p38 = scmp.eq.s32.totalorder %s16, 3
    %p39 = por %p37, %p38
    %p41 = scmp.ne.s32.totalorder %s24, %s40
    %p42 = scmp.eq.s32.totalorder %s16, 0
    %p43 = por %p41, %p42
    %s44 = ssub.s32 %s10, %s17
    %p45 = scmp.eq.s32.totalorder %s44, 0
    %s47 = sadd.s32 %s46, 1
    %s48 = scalar_select %p45, %s46, %s47
    %p51 = pneg %p45
    %p52 = scmp.eq.s32.totalorder %s10, 3
    %p53 = por %p51, %p52
    %p54 = scmp.ne.s32.totalorder %s46, %s49
    %p55 = scmp.eq.s32.totalorder %s10, 0
    %p56 = por %p54, %p55
    %p57 = scmp.ne.s32.totalorder %s46, %s49
    %p58 = scmp.eq.s32.totalorder %s15, 3
    %p59 = por %p57, %p58
    %p60 = scmp.ne.s32.totalorder %s49, %s50
    %p61 = scmp.eq.s32.totalorder %s15, 0
    %p62 = por %p60, %p61
    %p63 = scmp.ne.s32.totalorder %s49, %s50
    %p64 = scmp.eq.s32.totalorder %s16, 3
    %p65 = por %p63, %p64
    %p67 = scmp.ne.s32.totalorder %s50, %s66
    %p68 = scmp.eq.s32.totalorder %s16, 0
    %p69 = por %p67, %p68
    %s70 = ssub.s32 %s10, %s17
    %p71 = scmp.eq.s32.totalorder %s70, 0
    %s73 = sadd.s32 %s72, 1
    %s74 = scalar_select %p71, %s72, %s73
    %p77 = pneg %p71
    %p78 = scmp.eq.s32.totalorder %s10, 3
    %p79 = por %p77, %p78
    %p80 = scmp.ne.s32.totalorder %s72, %s75
    %p81 = scmp.eq.s32.totalorder %s10, 0
    %p82 = por %p80, %p81
    %p83 = scmp.ne.s32.totalorder %s72, %s75
    %p84 = scmp.eq.s32.totalorder %s15, 3
    %p85 = por %p83, %p84
    %p86 = scmp.ne.s32.totalorder %s75, %s76
    %p87 = scmp.eq.s32.totalorder %s15, 0
    %p88 = por %p86, %p87
    %p89 = scmp.ne.s32.totalorder %s75, %s76
    %p90 = scmp.eq.s32.totalorder %s16, 3
    %p91 = por %p89, %p90
    %p93 = scmp.ne.s32.totalorder %s76, %s92
    %p94 = scmp.eq.s32.totalorder %s16, 0
    %p95 = por %p93, %p94
    %s97 = sadd.s32 %s96, 1
    %p100 = scmp.eq.s32.totalorder %s10, 3
    %p101 = scmp.ne.s32.totalorder %s96, %s98
    %p102 = scmp.eq.s32.totalorder %s10, 0
    %p103 = por %p101, %p102
    %p104 = scmp.ne.s32.totalorder %s96, %s98
    %p105 = scmp.eq.s32.totalorder %s15, 3
    %p106 = por %p104, %p105
    %p107 = scmp.ne.s32.totalorder %s98, %s99
    %p108 = scmp.eq.s32.totalorder %s15, 0
    %p109 = por %p107, %p108
    %p110 = scmp.ne.s32.totalorder %s98, %s99
    %p111 = scmp.eq.s32.totalorder %s16, 3
    %p112 = por %p110, %p111
    %p114 = scmp.ne.s32.totalorder %s99, %s113
    %p115 = scmp.eq.s32.totalorder %s16, 0
    %p116 = por %p114, %p115
    %s117 = ssub.s32 %s10, %s17
    %p118 = scmp.eq.s32.totalorder %s117, 0
    %s120 = sadd.s32 %s119, 1
    %s121 = scalar_select %p118, %s119, %s120
    %p124 = pneg %p118
    %p125 = scmp.eq.s32.totalorder %s10, 3
    %p126 = por %p124, %p125
    %p127 = scmp.ne.s32.totalorder %s119, %s122
    %p128 = scmp.eq.s32.totalorder %s10, 0
    %p129 = por %p127, %p128
    %p130 = scmp.ne.s32.totalorder %s119, %s122
    %p131 = scmp.eq.s32.totalorder %s15, 3
    %p132 = por %p130, %p131
    %p133 = scmp.ne.s32.totalorder %s122, %s123
    %p134 = scmp.eq.s32.totalorder %s15, 0
    %p135 = por %p133, %p134
    %p136 = scmp.ne.s32.totalorder %s122, %s123
    %p137 = scmp.eq.s32.totalorder %s16, 3
    %p138 = por %p136, %p137
    %p140 = scmp.ne.s32.totalorder %s123, %s139
    %p141 = scmp.eq.s32.totalorder %s16, 0
    %p142 = por %p140, %p141
    %p143 = scmp.le.s32.totalorder 1, %s10
    %p144 = scmp.lt.s32.totalorder %s10, 5
    %p145 = pnand %p143, %p144
    %p146 = pneg %p145
    // Predicated region
    $region9: #{encoder_layer_pallas.4} parent=5 // pred_check
      _
    $region10: #{encoder_layer_pallas.4} parent=5 // pred_check_branch
      %148 = sbr.rel (%p145) target = $region12
    $region11: #{encoder_layer_pallas.4} parent=5 // pred_region
      %s149 = ssub.s32 %s10, 1
      // Predicated region
      $region13: #{encoder_layer_pallas.4} parent=11 // pred_check
        %p150 = pneg %p109
      $region14: #{encoder_layer_pallas.4} parent=11 // pred_check_branch
        %152 = sbr.rel (%p150) target = $region16
      $region15: #{encoder_layer_pallas.4} parent=11 // pred_region
        _
      $region16: #{encoder_layer_pallas.4} parent=11 // pred_fallthru
        _
    $region12: #{encoder_layer_pallas.4} parent=5 // pred_fallthru
      _
    %p153 = scmp.lt.s32.totalorder %s10, 4
    // Predicated region
    $region17: #{encoder_layer_pallas.4} parent=5 // pred_check
      %p154 = pneg %p153
    $region18: #{encoder_layer_pallas.4} parent=5 // pred_check_branch
      %156 = sbr.rel (%p154) target = $region20
    $region19: #{encoder_layer_pallas.4} parent=5 // pred_region
      // Predicated region
      $region21: #{encoder_layer_pallas.4} parent=19 // pred_check
        %p157 = pneg %p30
      $region22: #{encoder_layer_pallas.4} parent=19 // pred_check_branch
        %159 = sbr.rel (%p157) target = $region24
      $region23: #{encoder_layer_pallas.4} parent=19 // pred_region
        %s160 = smul.u32 2, %s10
        %p161 = scmp.lt.s32.totalorder %s160, 7
        %s162 = scalar_select %p161, %s160, 7
        %s163 = smul.addr %s162, 8
        %s164 = scalar_lea.vmem %s0, %s163
        %s165 = smul.u32 2, %s10
      $region24: #{encoder_layer_pallas.4} parent=19 // pred_fallthru
        _
      // Predicated region
      $region25: #{encoder_layer_pallas.4} parent=19 // pred_check
        %p166 = pneg %p56
      $region26: #{encoder_layer_pallas.4} parent=19 // pred_check_branch
        %168 = sbr.rel (%p166) target = $region28
      $region27: #{encoder_layer_pallas.4} parent=19 // pred_region
        %s169 = smul.u32 2, %s10
        %p170 = scmp.lt.s32.totalorder %s169, 7
        %s171 = scalar_select %p170, %s169, 7
        %s172 = smul.addr %s171, 8
        %s173 = scalar_lea.vmem %s1, %s172
        %s174 = smul.u32 2, %s10
      $region28: #{encoder_layer_pallas.4} parent=19 // pred_fallthru
        _
      // Predicated region
      $region29: #{encoder_layer_pallas.4} parent=19 // pred_check
        %p175 = pneg %p82
      $region30: #{encoder_layer_pallas.4} parent=19 // pred_check_branch
        %177 = sbr.rel (%p175) target = $region32
      $region31: #{encoder_layer_pallas.4} parent=19 // pred_region
        %s178 = smul.u32 2, %s10
        %p179 = scmp.lt.s32.totalorder %s178, 7
        %s180 = scalar_select %p179, %s178, 7
        %s181 = smul.addr %s180, 8
        %s182 = scalar_lea.vmem %s2, %s181
        %s183 = smul.u32 2, %s10
      $region32: #{encoder_layer_pallas.4} parent=19 // pred_fallthru
        _
    $region20: #{encoder_layer_pallas.4} parent=5 // pred_fallthru
      _
    %p184 = scmp.le.s32.totalorder 1, %s10
    %p185 = scmp.lt.s32.totalorder %s10, 5
    %p186 = pnand %p184, %p185
    %p187 = pneg %p186
    // Predicated region
    $region33: #{encoder_layer_pallas.4} parent=5 // pred_check
      _
    $region34: #{encoder_layer_pallas.4} parent=5 // pred_check_branch
      %189 = sbr.rel (%p186) target = $region36
    $region35: #{encoder_layer_pallas.4} parent=5 // pred_region
      %s190 = ssub.s32 %s10, 1
      %s191 = smul.u32 2, %s15
      %p192 = scmp.lt.s32.totalorder %s191, 7
      %s193 = scalar_select %p192, %s191, 7
      %s194 = smul.addr %s193, 8
      %s195 = scalar_lea.vmem %s0, %s194
      %p196 = pneg %p36
      %p197 = pneg %p33
      %s198 = smul.u32 2, %s15
      %p199 = scmp.lt.s32.totalorder %s198, 7
      %s200 = scalar_select %p199, %s198, 7
      %s201 = smul.addr %s200, 8
      %s202 = scalar_lea.vmem %s1, %s201
      %p203 = pneg %p62
      %p204 = pneg %p59
      %s205 = smul.u32 2, %s15
      %p206 = scmp.lt.s32.totalorder %s205, 7
      %s207 = scalar_select %p206, %s205, 7
      %s208 = smul.addr %s207, 8
      %s209 = scalar_lea.vmem %s2, %s208
      %p210 = pneg %p88
      %p211 = pneg %p85
      %p212 = pneg %p109
      %p213 = pneg %p106
      %p214 = pneg %p135
      %p215 = pneg %p132
      %s216 = smul.u32 2, %s15
      %p217 = scmp.lt.s32.totalorder %s216, 7
      %s218 = scalar_select %p217, %s216, 7
      %s219 = smul.addr %s218, 8
      %s220 = scalar_lea.vmem %s4, %s219
      %s221 = smul.u32 2, %s15
      %p222 = scmp.lt.s32.totalorder %s221, 7
      %s223 = scalar_select %p222, %s221, 7
      %s224 = smul.addr %s223, 8
      %s225 = scalar_lea.vmem %s0, %s224
      %s226 = smul.u32 2, %s15
      %s227 = smul.u32 2, %s15
      %p228 = scmp.lt.s32.totalorder %s227, 7
      %s229 = scalar_select %p228, %s227, 7
      %s230 = smul.addr %s229, 8
      %s231 = scalar_lea.vmem %s1, %s230
      %s232 = smul.u32 2, %s15
      %s233 = smul.u32 2, %s15
      %p234 = scmp.lt.s32.totalorder %s233, 7
      %s235 = scalar_select %p234, %s233, 7
      %s236 = smul.addr %s235, 8
      %s237 = scalar_lea.vmem %s2, %s236
      %s238 = smul.u32 2, %s15
      %s239 = smul.u32 2, %s15
      %p240 = scmp.lt.s32.totalorder %s239, 7
      %s241 = scalar_select %p240, %s239, 7
      %s242 = smul.addr %s241, 8
      %s243 = scalar_lea.vmem %s4, %s242
      %s244 = smul.u32 2, %s15
      %v245 = vld [vmem:[%s225] sm:$0xff]
      %v246 = vld [vmem:[%s225 + $0x8] sm:$0xff]
      %v247 = vmul.f32 %v245, 0.35355338
      %v248 = vmul.f32 %v246, 0.35355338
      %v249 = vld [vmem:[%s231] sm:$0xff]
      %v250 = vld [vmem:[%s231 + $0x8] sm:$0xff]
      %v251 = vld [vmem:[%s3] sm:$0x3]
      %v254 = vunpack.c.l.s4 1966171168
      %v255 = vunpack.c.0.s8 %v254
      %v256 = vlaneseq
      %v257 = vshrl.u32 %v256, 7
      %v258 = vsub.s32 %v255, %v257
      %v259 = vrot.slane %v251, %v258
      %v260 = vcombine.high %v259, %v259
      %v262 = vunpack.c.l.s4 1966171168
      %v263 = vunpack.c.0.s8 %v262
      %v264 = vlaneseq
      %v265 = vshrl.u32 %v264, 7
      %v266 = vsub.s32 %v263, %v265
      %v267 = vrot.slane %v259, %v266
      %v269 = vunpack.c.l.s4 1966171168
      %v270 = vunpack.c.0.s8 %v269
      %v271 = vlaneseq
      %v272 = vshrl.u32 %v271, 7
      %v273 = vsub.s32 %v270, %v272
      %v274 = vrot.slane %v260, %v273
      %v275 = vlaneseq
      %v276 = vshrl.u32 %v275, 7
      %v277 = vsub.s32 0, %v276
      %v278 = vrot.slane %v267, %v277
      %v279 = vlaneseq
      %v280 = vshrl.u32 %v279, 7
      %v281 = vsub.s32 0, %v280
      %v282 = vrot.slane %v274, %v281
      %vm285 = vcmask 64512
      %v287 = vsel %vm285, %v247, 0
      %v290 = vsel %vm285, %v249, 0
      %292 = vmatprep.subr.mxu0 0.0
      %293 = vmatpush1.xpose.msra.mxu0 %v290
      %294 = vmatprep.subr.mxu0 0.0
      %295 = vmatpush1.xpose.msra.mxu0 0.0
      %296 = vmatprep.subr.mxu0 0.0
      %297 = vmatpush1.xpose.msra.mxu0 0.0
      %298 = vmatprep.subr.mxu0 0.0
      %299 = vmatpush1.xpose.msra.mxu0 0.0
      %300 = vmatprep.subr.mxu0 0.0
      %301 = vmatpush1.xpose.msra.mxu0 0.0
      %302 = vmatprep.subr.mxu0 0.0
      %303 = vmatpush1.xpose.msra.mxu0 0.0
      %304 = vmatprep.subr.mxu0 0.0
      %305 = vmatpush1.xpose.msra.mxu0 0.0
      %306 = vmatprep.subr.mxu0 0.0
      %307 = vmatpush1.xpose.msra.mxu0 0.0
      %308 = vmatprep.subr.mxu0 0.0
      %309 = vmatpush1.xpose.msra.mxu0 0.0
      %310 = vmatprep.subr.mxu0 0.0
      %311 = vmatpush1.xpose.msra.mxu0 0.0
      %312 = vmatprep.subr.mxu0 0.0
      %313 = vmatpush1.xpose.msra.mxu0 0.0
      %314 = vmatprep.subr.mxu0 0.0
      %315 = vmatpush1.xpose.msra.mxu0 0.0
      %316 = vmatprep.subr.mxu0 0.0
      %317 = vmatpush1.xpose.msra.mxu0 0.0
      %318 = vmatprep.subr.mxu0 0.0
      %319 = vmatpush1.xpose.msra.mxu0 0.0
      %320 = vmatprep.subr.mxu0 0.0
      %321 = vmatpush1.xpose.msra.mxu0 0.0
      %322 = vmatprep.subr.mxu0 0.0
      %323 = vmatpush1.xpose.msra.mxu0 0.0
      %324 = vmatprep.subr.mxu0 0.0
      %325 = vmatpush1.xpose.msra.mxu0 0.0
      %326 = vmatprep.subr.mxu0 0.0
      %327 = vmatpush1.xpose.msra.mxu0 0.0
      %328 = vmatprep.subr.mxu0 0.0
      %329 = vmatpush1.xpose.msra.mxu0 0.0
      %330 = vmatprep.subr.mxu0 0.0
      %331 = vmatpush1.xpose.msra.mxu0 0.0
      %332 = vmatprep.subr.mxu0 0.0
      %333 = vmatpush1.xpose.msra.mxu0 0.0
      %334 = vmatprep.subr.mxu0 0.0
      %335 = vmatpush1.xpose.msra.mxu0 0.0
      %336 = vmatprep.subr.mxu0 0.0
      %337 = vmatpush1.xpose.msra.mxu0 0.0
      %338 = vmatprep.subr.mxu0 0.0
      %339 = vmatpush1.xpose.msra.mxu0 0.0
      %340 = vmatprep.subr.mxu0 0.0
      %341 = vmatpush1.xpose.msra.mxu0 0.0
      %342 = vmatprep.subr.mxu0 0.0
      %343 = vmatpush1.xpose.msra.mxu0 0.0
      %344 = vmatprep.subr.mxu0 0.0
      %345 = vmatpush1.xpose.msra.mxu0 0.0
      %346 = vmatprep.subr.mxu0 0.0
      %347 = vmatpush1.xpose.msra.mxu0 0.0
      %348 = vmatprep.subr.mxu0 0.0
      %349 = vmatpush1.xpose.msra.mxu0 0.0
      %350 = vmatprep.subr.mxu0 0.0
      %351 = vmatpush1.xpose.msra.mxu0 0.0
      %352 = vmatprep.subr.mxu0 0.0
      %353 = vmatpush1.xpose.msra.mxu0 0.0
      %354 = vmatprep.subr.mxu0 0.0
      %355 = vmatpush1.xpose.msra.mxu0 0.0
      %356 = vmatprep.mubr.f32.mxu0 0.0
      %357 = vmatmul.mubr.f32.gmra.mrb[0].mxu0 %v287
      %v358 = vpop.f32.mrb[0].mxu0
      %v359 = vadd.f32 %v278, %v358
      %v360 = vpop.f32.mrb[0].mxu0
      %361 = vdwg.mxu0
      %v363 = vsel %vm285, %v248, 0
      %v366 = vsel %vm285, %v250, 0
      %368 = vmatprep.subr.mxu0 0.0
      %369 = vmatpush1.xpose.msra.mxu0 %v366
      %370 = vmatprep.subr.mxu0 0.0
      %371 = vmatpush1.xpose.msra.mxu0 0.0
      %372 = vmatprep.subr.mxu0 0.0
      %373 = vmatpush1.xpose.msra.mxu0 0.0
      %374 = vmatprep.subr.mxu0 0.0
      %375 = vmatpush1.xpose.msra.mxu0 0.0
      %376 = vmatprep.subr.mxu0 0.0
      %377 = vmatpush1.xpose.msra.mxu0 0.0
      %378 = vmatprep.subr.mxu0 0.0
      %379 = vmatpush1.xpose.msra.mxu0 0.0
      %380 = vmatprep.subr.mxu0 0.0
      %381 = vmatpush1.xpose.msra.mxu0 0.0
      %382 = vmatprep.subr.mxu0 0.0
      %383 = vmatpush1.xpose.msra.mxu0 0.0
      %384 = vmatprep.subr.mxu0 0.0
      %385 = vmatpush1.xpose.msra.mxu0 0.0
      %386 = vmatprep.subr.mxu0 0.0
      %387 = vmatpush1.xpose.msra.mxu0 0.0
      %388 = vmatprep.subr.mxu0 0.0
      %389 = vmatpush1.xpose.msra.mxu0 0.0
      %390 = vmatprep.subr.mxu0 0.0
      %391 = vmatpush1.xpose.msra.mxu0 0.0
      %392 = vmatprep.subr.mxu0 0.0
      %393 = vmatpush1.xpose.msra.mxu0 0.0
      %394 = vmatprep.subr.mxu0 0.0
      %395 = vmatpush1.xpose.msra.mxu0 0.0
      %396 = vmatprep.subr.mxu0 0.0
      %397 = vmatpush1.xpose.msra.mxu0 0.0
      %398 = vmatprep.subr.mxu0 0.0
      %399 = vmatpush1.xpose.msra.mxu0 0.0
      %400 = vmatprep.subr.mxu0 0.0
      %401 = vmatpush1.xpose.msra.mxu0 0.0
      %402 = vmatprep.subr.mxu0 0.0
      %403 = vmatpush1.xpose.msra.mxu0 0.0
      %404 = vmatprep.subr.mxu0 0.0
      %405 = vmatpush1.xpose.msra.mxu0 0.0
      %406 = vmatprep.subr.mxu0 0.0
      %407 = vmatpush1.xpose.msra.mxu0 0.0
      %408 = vmatprep.subr.mxu0 0.0
      %409 = vmatpush1.xpose.msra.mxu0 0.0
      %410 = vmatprep.subr.mxu0 0.0
      %411 = vmatpush1.xpose.msra.mxu0 0.0
      %412 = vmatprep.subr.mxu0 0.0
      %413 = vmatpush1.xpose.msra.mxu0 0.0
      %414 = vmatprep.subr.mxu0 0.0
      %415 = vmatpush1.xpose.msra.mxu0 0.0
      %416 = vmatprep.subr.mxu0 0.0
      %417 = vmatpush1.xpose.msra.mxu0 0.0
      %418 = vmatprep.subr.mxu0 0.0
      %419 = vmatpush1.xpose.msra.mxu0 0.0
      %420 = vmatprep.subr.mxu0 0.0
      %421 = vmatpush1.xpose.msra.mxu0 0.0
      %422 = vmatprep.subr.mxu0 0.0
      %423 = vmatpush1.xpose.msra.mxu0 0.0
      %424 = vmatprep.subr.mxu0 0.0
      %425 = vmatpush1.xpose.msra.mxu0 0.0
      %426 = vmatprep.subr.mxu0 0.0
      %427 = vmatpush1.xpose.msra.mxu0 0.0
      %428 = vmatprep.subr.mxu0 0.0
      %429 = vmatpush1.xpose.msra.mxu0 0.0
      %430 = vmatprep.subr.mxu0 0.0
      %431 = vmatpush1.xpose.msra.mxu0 0.0
      %432 = vmatprep.mubr.f32.mxu0 0.0
      %433 = vmatmul.mubr.f32.gmra.mrb[0].mxu0 %v363
      %v434 = vpop.f32.mrb[0].mxu0
      %v435 = vadd.f32 %v282, %v434
      %v436 = vpop.f32.mrb[0].mxu0
      %437 = vdwg.mxu0
      %v438 = vsel %vm285, %v359, -inf
      %439 = vmax.xlane.f32.xlu0 %v438
      %v440 = vpop.xlane.xlu0 %439
      %v441 = vsel %vm285, %v435, -inf
      %442 = vmax.xlane.f32.xlu0 %v441
      %v443 = vpop.xlane.xlu0 %442
      %v444 = vsub.f32 %v359, %v440
      %v445 = vsub.f32 %v435, %v443
      %v446 = vmul.f32 %v444, 1.442695
      %v447 = vpow.pop %v446
      %v448 = vmul.f32 %v445, 1.442695
      %v449 = vpow.pop %v448
      %v450 = vsel %vm285, %v447, 0.0
      %451 = vadd.xlane.f32.xlu0 %v450
      %v452 = vpop.xlane.xlu0 %451
      %v453 = vsel %vm285, %v449, 0.0
      %454 = vadd.xlane.f32.xlu0 %v453
      %v455 = vpop.xlane.xlu0 %454
      %v456 = vld [vmem:[%s237] sm:$0xff]
      %v457 = vld [vmem:[%s237 + $0x8] sm:$0xff]
      %v459 = vsel %vm285, %v447, 0
      %461 = vmatprep.subr.mxu0 0.0
      %462 = vmatpush1.msra.mxu0 %v456
      %463 = vmatprep.subr.mxu0 0.0
      %464 = vmatpush1.msra.mxu0 0.0
      %465 = vmatprep.subr.mxu0 0.0
      %466 = vmatpush1.msra.mxu0 0.0
      %467 = vmatprep.subr.mxu0 0.0
      %468 = vmatpush1.msra.mxu0 0.0
      %469 = vmatprep.subr.mxu0 0.0
      %470 = vmatpush1.msra.mxu0 0.0
      %471 = vmatprep.subr.mxu0 0.0
      %472 = vmatpush1.msra.mxu0 0.0
      %473 = vmatprep.subr.mxu0 0.0
      %474 = vmatpush1.msra.mxu0 0.0
      %475 = vmatprep.subr.mxu0 0.0
      %476 = vmatpush1.msra.mxu0 0.0
      %477 = vmatprep.subr.mxu0 0.0
      %478 = vmatpush1.msra.mxu0 0.0
      %479 = vmatprep.subr.mxu0 0.0
      %480 = vmatpush1.msra.mxu0 0.0
      %481 = vmatprep.subr.mxu0 0.0
      %482 = vmatpush1.msra.mxu0 0.0
      %483 = vmatprep.subr.mxu0 0.0
      %484 = vmatpush1.msra.mxu0 0.0
      %485 = vmatprep.subr.mxu0 0.0
      %486 = vmatpush1.msra.mxu0 0.0
      %487 = vmatprep.subr.mxu0 0.0
      %488 = vmatpush1.msra.mxu0 0.0
      %489 = vmatprep.subr.mxu0 0.0
      %490 = vmatpush1.msra.mxu0 0.0
      %491 = vmatprep.subr.mxu0 0.0
      %492 = vmatpush1.msra.mxu0 0.0
      %493 = vmatprep.subr.mxu0 0.0
      %494 = vmatpush1.msra.mxu0 0.0
      %495 = vmatprep.subr.mxu0 0.0
      %496 = vmatpush1.msra.mxu0 0.0
      %497 = vmatprep.subr.mxu0 0.0
      %498 = vmatpush1.msra.mxu0 0.0
      %499 = vmatprep.subr.mxu0 0.0
      %500 = vmatpush1.msra.mxu0 0.0
      %501 = vmatprep.subr.mxu0 0.0
      %502 = vmatpush1.msra.mxu0 0.0
      %503 = vmatprep.subr.mxu0 0.0
      %504 = vmatpush1.msra.mxu0 0.0
      %505 = vmatprep.subr.mxu0 0.0
      %506 = vmatpush1.msra.mxu0 0.0
      %507 = vmatprep.subr.mxu0 0.0
      %508 = vmatpush1.msra.mxu0 0.0
      %509 = vmatprep.subr.mxu0 0.0
      %510 = vmatpush1.msra.mxu0 0.0
      %511 = vmatprep.subr.mxu0 0.0
      %512 = vmatpush1.msra.mxu0 0.0
      %513 = vmatprep.subr.mxu0 0.0
      %514 = vmatpush1.msra.mxu0 0.0
      %515 = vmatprep.subr.mxu0 0.0
      %516 = vmatpush1.msra.mxu0 0.0
      %517 = vmatprep.subr.mxu0 0.0
      %518 = vmatpush1.msra.mxu0 0.0
      %519 = vmatprep.subr.mxu0 0.0
      %520 = vmatpush1.msra.mxu0 0.0
      %521 = vmatprep.subr.mxu0 0.0
      %522 = vmatpush1.msra.mxu0 0.0
      %523 = vmatprep.subr.mxu0 0.0
      %524 = vmatpush1.msra.mxu0 0.0
      %525 = vmatprep.mubr.f32.mxu0 0.0
      %526 = vmatmul.mubr.f32.gmra.mrb[0].mxu0 %v459
      %v527 = vpop.f32.mrb[0].mxu0
      %v528 = vadd.f32 0.0, %v527
      %v529 = vpop.f32.mrb[0].mxu0
      %530 = vdwg.mxu0
      %v532 = vsel %vm285, %v449, 0
      %534 = vmatprep.subr.mxu0 0.0
      %535 = vmatpush1.msra.mxu0 %v457
      %536 = vmatprep.subr.mxu0 0.0
      %537 = vmatpush1.msra.mxu0 0.0
      %538 = vmatprep.subr.mxu0 0.0
      %539 = vmatpush1.msra.mxu0 0.0
      %540 = vmatprep.subr.mxu0 0.0
      %541 = vmatpush1.msra.mxu0 0.0
      %542 = vmatprep.subr.mxu0 0.0
      %543 = vmatpush1.msra.mxu0 0.0
      %544 = vmatprep.subr.mxu0 0.0
      %545 = vmatpush1.msra.mxu0 0.0
      %546 = vmatprep.subr.mxu0 0.0
      %547 = vmatpush1.msra.mxu0 0.0
      %548 = vmatprep.subr.mxu0 0.0
      %549 = vmatpush1.msra.mxu0 0.0
      %550 = vmatprep.subr.mxu0 0.0
      %551 = vmatpush1.msra.mxu0 0.0
      %552 = vmatprep.subr.mxu0 0.0
      %553 = vmatpush1.msra.mxu0 0.0
      %554 = vmatprep.subr.mxu0 0.0
      %555 = vmatpush1.msra.mxu0 0.0
      %556 = vmatprep.subr.mxu0 0.0
      %557 = vmatpush1.msra.mxu0 0.0
      %558 = vmatprep.subr.mxu0 0.0
      %559 = vmatpush1.msra.mxu0 0.0
      %560 = vmatprep.subr.mxu0 0.0
      %561 = vmatpush1.msra.mxu0 0.0
      %562 = vmatprep.subr.mxu0 0.0
      %563 = vmatpush1.msra.mxu0 0.0
      %564 = vmatprep.subr.mxu0 0.0
      %565 = vmatpush1.msra.mxu0 0.0
      %566 = vmatprep.subr.mxu0 0.0
      %567 = vmatpush1.msra.mxu0 0.0
      %568 = vmatprep.subr.mxu0 0.0
      %569 = vmatpush1.msra.mxu0 0.0
      %570 = vmatprep.subr.mxu0 0.0
      %571 = vmatpush1.msra.mxu0 0.0
      %572 = vmatprep.subr.mxu0 0.0
      %573 = vmatpush1.msra.mxu0 0.0
      %574 = vmatprep.subr.mxu0 0.0
      %575 = vmatpush1.msra.mxu0 0.0
      %576 = vmatprep.subr.mxu0 0.0
      %577 = vmatpush1.msra.mxu0 0.0
      %578 = vmatprep.subr.mxu0 0.0
      %579 = vmatpush1.msra.mxu0 0.0
      %580 = vmatprep.subr.mxu0 0.0
      %581 = vmatpush1.msra.mxu0 0.0
      %582 = vmatprep.subr.mxu0 0.0
      %583 = vmatpush1.msra.mxu0 0.0
      %584 = vmatprep.subr.mxu0 0.0
      %585 = vmatpush1.msra.mxu0 0.0
      %586 = vmatprep.subr.mxu0 0.0
      %587 = vmatpush1.msra.mxu0 0.0
      %588 = vmatprep.subr.mxu0 0.0
      %589 = vmatpush1.msra.mxu0 0.0
      %590 = vmatprep.subr.mxu0 0.0
      %591 = vmatpush1.msra.mxu0 0.0
      %592 = vmatprep.subr.mxu0 0.0
      %593 = vmatpush1.msra.mxu0 0.0
      %594 = vmatprep.subr.mxu0 0.0
      %595 = vmatpush1.msra.mxu0 0.0
      %596 = vmatprep.subr.mxu0 0.0
      %597 = vmatpush1.msra.mxu0 0.0
      %598 = vmatprep.mubr.f32.mxu0 0.0
      %599 = vmatmul.mubr.f32.gmra.mrb[0].mxu0 %v532
      %v600 = vpop.f32.mrb[0].mxu0
      %v601 = vadd.f32 0.0, %v600
      %v602 = vpop.f32.mrb[0].mxu0
      %603 = vdwg.mxu0
      %v604 = vrcp.pop %v452
      %v605 = vmul.f32 1.0, %v604
      %v606 = vrcp.pop %v455
      %v607 = vmul.f32 1.0, %v606
      %v608 = vmul.f32 %v528, %v605
      %v609 = vmul.f32 %v601, %v607
      %610 = vst.msk [vmem:[%s243] sm:$0xff] %vm285, %v608
      %611 = vst.msk [vmem:[%s243 + $0x8] sm:$0xff] %vm285, %v609
      %s612 = smul.u32 2, %s15
      %p613 = scmp.lt.s32.totalorder %s612, 7
      %s614 = scalar_select %p613, %s612, 7
      %s615 = smul.addr %s614, 8
      %s616 = scalar_lea.vmem %s4, %s615
      // Predicated region
      $region37: #{encoder_layer_pallas.4} parent=35 // pred_check
        %p617 = pneg %p132
      $region38: #{encoder_layer_pallas.4} parent=35 // pred_check_branch
        %619 = sbr.rel (%p617) target = $region40
      $region39: #{encoder_layer_pallas.4} parent=35 // pred_region
        %s620 = smul.u32 2, %s15
      $region40: #{encoder_layer_pallas.4} parent=35 // pred_fallthru
        _
    $region36: #{encoder_layer_pallas.4} parent=5 // pred_fallthru
      _
    %p621 = scmp.le.s32.totalorder 2, %s10
    // Predicated region
    $region41: #{encoder_layer_pallas.4} parent=5 // pred_check
      %p622 = pneg %p621
    $region42: #{encoder_layer_pallas.4} parent=5 // pred_check_branch
      %624 = sbr.rel (%p622) target = $region44
    $region43: #{encoder_layer_pallas.4} parent=5 // pred_region
      %s625 = ssub.s32 %s10, 2
      // Predicated region
      $region45: #{encoder_layer_pallas.4} parent=43 // pred_check
        %p626 = pneg %p138
      $region46: #{encoder_layer_pallas.4} parent=43 // pred_check_branch
        %628 = sbr.rel (%p626) target = $region48
      $region47: #{encoder_layer_pallas.4} parent=43 // pred_region
        %s629 = smul.u32 2, %s16
        %p630 = scmp.lt.s32.totalorder %s629, 7
        %s631 = scalar_select %p630, %s629, 7
        %s632 = smul.addr %s631, 8
        %s633 = scalar_lea.vmem %s4, %s632
      $region48: #{encoder_layer_pallas.4} parent=43 // pred_fallthru
        _
    $region44: #{encoder_layer_pallas.4} parent=5 // pred_fallthru
      _
  $region6: #{encoder_layer_pallas.4} parent=0 // loop_footer
    %s14 = sadd.s32 1, %s10
  $region7: #{encoder_layer_pallas.4} parent=0 // loop_footer_branch
    %9 = sbr.rel target = $region3
  $region8: #{encoder_layer_pallas.4} parent=0 // loop_exit
    _

// kernel: encoder_layer_pallas.5
$region0: #{encoder_layer_pallas.5}
  #allocation0 [shape = 'u32[]', space=smem, size = 0x4, offset = 0x4, fixed_abs, tag = 'smem constant byte address 0x4 - core index']
  #allocation1 [shape = 'u32[144,128]{1,0:T(1,128)}', space=vmem, size = 0x12000, scoped, tag = 'internal scratch']
  %s0 = inlined_call_operand.vmem [shape: f32[16,32], index: 0, kind: input, shape index: {}]
  %s1 = inlined_call_operand.vmem [shape: f32[16,32], index: 1, kind: input, shape index: {}]
  %s2 = inlined_call_operand.vmem [shape: f32[32,32], index: 2, kind: input, shape index: {}]
  %s3 = inlined_call_operand.vmem [shape: f32[1,32], index: 3, kind: input, shape index: {}]
  %s4 = inlined_call_operand.vmem [shape: f32[32,64], index: 4, kind: input, shape index: {}]
  %s5 = inlined_call_operand.vmem [shape: f32[1,64], index: 5, kind: input, shape index: {}]
  %s6 = inlined_call_operand.vmem [shape: f32[64,32], index: 6, kind: input, shape index: {}]
  %s7 = inlined_call_operand.vmem [shape: f32[1,32], index: 7, kind: input, shape index: {}]
  %s8 = inlined_call_operand.vmem [shape: f32[1,32], index: 8, kind: input, shape index: {}]
  %s9 = inlined_call_operand.vmem [shape: f32[1,32], index: 9, kind: input, shape index: {}]
  %s10 = inlined_call_operand.vmem [shape: f32[1,32], index: 10, kind: input, shape index: {}]
  %s11 = inlined_call_operand.vmem [shape: f32[1,32], index: 11, kind: input, shape index: {}]
  %s12 = inlined_call_operand.hbm [shape: f32[16,32], index: 12, kind: output, shape index: {}]
  %s13 = sld [smem:[#allocation0]]
  $region58: #{encoder_layer_pallas.5} parent=0
    _
  %s15 = ssub.s32 1, %s13
  %s16 = scalar_select 0, %s15, %s13
  $region1: #{encoder_layer_pallas.5} parent=0
    #allocation2 [shape = 'u8[8192]{0}', space=vmem, size = 0x2000, scoped, tag = 'output window, operand 0, single buffered']
    #allocation3 [shape = 's32[1]{0}', space=sflag, size = 0x4, scoped, tag = 'scoped memory for encoder_layer_pallas.5']
    %17 = vsyncpa [#allocation3], 0
    // Predicated region
    $region2: #{encoder_layer_pallas.5} parent=1 // pred_check
      _
    $region3: #{encoder_layer_pallas.5} parent=1 // pred_check_branch
      %19 = sbr.rel (0) target = $region5
    $region4: #{encoder_layer_pallas.5} parent=1 // pred_region
      _
    $region5: #{encoder_layer_pallas.5} parent=1 // pred_fallthru
      _
    // Predicated region
    $region6: #{encoder_layer_pallas.5} parent=1 // pred_check
      _
    $region7: #{encoder_layer_pallas.5} parent=1 // pred_check_branch
      %21 = sbr.rel (0) target = $region9
    $region8: #{encoder_layer_pallas.5} parent=1 // pred_region
      _
    $region9: #{encoder_layer_pallas.5} parent=1 // pred_fallthru
      _
    // Predicated region
    $region10: #{encoder_layer_pallas.5} parent=1 // pred_check
      _
    $region11: #{encoder_layer_pallas.5} parent=1 // pred_check_branch
      %23 = sbr.rel (0) target = $region13
    $region12: #{encoder_layer_pallas.5} parent=1 // pred_region
      _
    $region13: #{encoder_layer_pallas.5} parent=1 // pred_fallthru
      _
    // Predicated region
    $region14: #{encoder_layer_pallas.5} parent=1 // pred_check
      _
    $region15: #{encoder_layer_pallas.5} parent=1 // pred_check_branch
      %25 = sbr.rel (0) target = $region17
    $region16: #{encoder_layer_pallas.5} parent=1 // pred_region
      _
    $region17: #{encoder_layer_pallas.5} parent=1 // pred_fallthru
      _
    // Predicated region
    $region18: #{encoder_layer_pallas.5} parent=1 // pred_check
      _
    $region19: #{encoder_layer_pallas.5} parent=1 // pred_check_branch
      %27 = sbr.rel (0) target = $region21
    $region20: #{encoder_layer_pallas.5} parent=1 // pred_region
      _
    $region21: #{encoder_layer_pallas.5} parent=1 // pred_fallthru
      _
    // Predicated region
    $region22: #{encoder_layer_pallas.5} parent=1 // pred_check
      _
    $region23: #{encoder_layer_pallas.5} parent=1 // pred_check_branch
      %29 = sbr.rel (0) target = $region25
    $region24: #{encoder_layer_pallas.5} parent=1 // pred_region
      _
    $region25: #{encoder_layer_pallas.5} parent=1 // pred_fallthru
      _
    // Predicated region
    $region26: #{encoder_layer_pallas.5} parent=1 // pred_check
      _
    $region27: #{encoder_layer_pallas.5} parent=1 // pred_check_branch
      %31 = sbr.rel (0) target = $region29
    $region28: #{encoder_layer_pallas.5} parent=1 // pred_region
      _
    $region29: #{encoder_layer_pallas.5} parent=1 // pred_fallthru
      _
    // Predicated region
    $region30: #{encoder_layer_pallas.5} parent=1 // pred_check
      _
    $region31: #{encoder_layer_pallas.5} parent=1 // pred_check_branch
      %33 = sbr.rel (0) target = $region33
    $region32: #{encoder_layer_pallas.5} parent=1 // pred_region
      _
    $region33: #{encoder_layer_pallas.5} parent=1 // pred_fallthru
      _
    // Predicated region
    $region34: #{encoder_layer_pallas.5} parent=1 // pred_check
      _
    $region35: #{encoder_layer_pallas.5} parent=1 // pred_check_branch
      %35 = sbr.rel (0) target = $region37
    $region36: #{encoder_layer_pallas.5} parent=1 // pred_region
      _
    $region37: #{encoder_layer_pallas.5} parent=1 // pred_fallthru
      _
    // Predicated region
    $region38: #{encoder_layer_pallas.5} parent=1 // pred_check
      _
    $region39: #{encoder_layer_pallas.5} parent=1 // pred_check_branch
      %37 = sbr.rel (0) target = $region41
    $region40: #{encoder_layer_pallas.5} parent=1 // pred_region
      _
    $region41: #{encoder_layer_pallas.5} parent=1 // pred_fallthru
      _
    // Predicated region
    $region42: #{encoder_layer_pallas.5} parent=1 // pred_check
      _
    $region43: #{encoder_layer_pallas.5} parent=1 // pred_check_branch
      %39 = sbr.rel (0) target = $region45
    $region44: #{encoder_layer_pallas.5} parent=1 // pred_region
      _
    $region45: #{encoder_layer_pallas.5} parent=1 // pred_fallthru
      _
    // Predicated region
    $region46: #{encoder_layer_pallas.5} parent=1 // pred_check
      _
    $region47: #{encoder_layer_pallas.5} parent=1 // pred_check_branch
      %41 = sbr.rel (0) target = $region49
    $region48: #{encoder_layer_pallas.5} parent=1 // pred_region
      _
    $region49: #{encoder_layer_pallas.5} parent=1 // pred_fallthru
      _
    %v42 = vld [vmem:[%s1] sm:$0xff]
    %v43 = vld [vmem:[%s1 + $0x8] sm:$0xff]
    %v44 = vld [vmem:[%s0] sm:$0xff]
    %v45 = vld [vmem:[%s0 + $0x8] sm:$0xff]
    %v46 = vld [vmem:[%s2] sm:$0xff]
    %v47 = vld [vmem:[%s2 + $0x8] sm:$0xff]
    %v48 = vld [vmem:[%s2 + $0x10] sm:$0xff]
    %v49 = vld [vmem:[%s2 + $0x18] sm:$0xff]
    %v50 = vld [vmem:[%s3] sm:$0x1]
    %v52 = vlaneseq
    %v53 = vshrl.u32 %v52, 7
    %v54 = vsub.s32 0, %v53
    %v55 = vrot.slane %v50, %v54
    %vm57 = vcmask 261120
    %v59 = vsel %vm57, %v44, 0
    %v62 = vsel %vm57, %v45, 0
    %64 = vmatprep.subr.mxu0 0.0
    %65 = vmatpush1.msra.mxu0 %v46
    %66 = vmatprep.subr.mxu0 0.0
    %67 = vmatpush1.msra.mxu0 %v47
    %68 = vmatprep.subr.mxu0 0.0
    %69 = vmatpush1.msra.mxu0 %v48
    %70 = vmatprep.subr.mxu0 0.0
    %71 = vmatpush1.msra.mxu0 %v49
    %72 = vmatprep.subr.mxu0 0.0
    %73 = vmatpush1.msra.mxu0 0.0
    %74 = vmatprep.subr.mxu0 0.0
    %75 = vmatpush1.msra.mxu0 0.0
    %76 = vmatprep.subr.mxu0 0.0
    %77 = vmatpush1.msra.mxu0 0.0
    %78 = vmatprep.subr.mxu0 0.0
    %79 = vmatpush1.msra.mxu0 0.0
    %80 = vmatprep.subr.mxu0 0.0
    %81 = vmatpush1.msra.mxu0 0.0
    %82 = vmatprep.subr.mxu0 0.0
    %83 = vmatpush1.msra.mxu0 0.0
    %84 = vmatprep.subr.mxu0 0.0
    %85 = vmatpush1.msra.mxu0 0.0
    %86 = vmatprep.subr.mxu0 0.0
    %87 = vmatpush1.msra.mxu0 0.0
    %88 = vmatprep.subr.mxu0 0.0
    %89 = vmatpush1.msra.mxu0 0.0
    %90 = vmatprep.subr.mxu0 0.0
    %91 = vmatpush1.msra.mxu0 0.0
    %92 = vmatprep.subr.mxu0 0.0
    %93 = vmatpush1.msra.mxu0 0.0
    %94 = vmatprep.subr.mxu0 0.0
    %95 = vmatpush1.msra.mxu0 0.0
    %96 = vmatprep.subr.mxu0 0.0
    %97 = vmatpush1.msra.mxu0 0.0
    %98 = vmatprep.subr.mxu0 0.0
    %99 = vmatpush1.msra.mxu0 0.0
    %100 = vmatprep.subr.mxu0 0.0
    %101 = vmatpush1.msra.mxu0 0.0
    %102 = vmatprep.subr.mxu0 0.0
    %103 = vmatpush1.msra.mxu0 0.0
    %104 = vmatprep.subr.mxu0 0.0
    %105 = vmatpush1.msra.mxu0 0.0
    %106 = vmatprep.subr.mxu0 0.0
    %107 = vmatpush1.msra.mxu0 0.0
    %108 = vmatprep.subr.mxu0 0.0
    %109 = vmatpush1.msra.mxu0 0.0
    %110 = vmatprep.subr.mxu0 0.0
    %111 = vmatpush1.msra.mxu0 0.0
    %112 = vmatprep.subr.mxu0 0.0
    %113 = vmatpush1.msra.mxu0 0.0
    %114 = vmatprep.subr.mxu0 0.0
    %115 = vmatpush1.msra.mxu0 0.0
    %116 = vmatprep.subr.mxu0 0.0
    %117 = vmatpush1.msra.mxu0 0.0
    %118 = vmatprep.subr.mxu0 0.0
    %119 = vmatpush1.msra.mxu0 0.0
    %120 = vmatprep.subr.mxu0 0.0
    %121 = vmatpush1.msra.mxu0 0.0
    %122 = vmatprep.subr.mxu0 0.0
    %123 = vmatpush1.msra.mxu0 0.0
    %124 = vmatprep.subr.mxu0 0.0
    %125 = vmatpush1.msra.mxu0 0.0
    %126 = vmatprep.subr.mxu0 0.0
    %127 = vmatpush1.msra.mxu0 0.0
    %128 = vmatprep.mubr.f32.mxu0 0.0
    %129 = vmatmul.mubr.f32.gmra.mrb[0].mxu0 %v59
    %v130 = vpop.f32.mrb[0].mxu0
    %v131 = vadd.f32 %v55, %v130
    %v132 = vpop.f32.mrb[0].mxu0
    %133 = vmatprep.mubr.f32.mxu0 0.0
    %134 = vmatmul.mubr.f32.gmra.mrb[0].mxu0 %v62
    %v135 = vpop.f32.mrb[0].mxu0
    %v136 = vadd.f32 %v55, %v135
    %v137 = vpop.f32.mrb[0].mxu0
    %138 = vdwg.mxu0
    %v139 = vadd.f32 %v42, %v131
    %v140 = vadd.f32 %v43, %v136
    %v141 = vld [vmem:[%s8] sm:$0x1]
    %v142 = vld [vmem:[%s9] sm:$0x1]
    %v143 = vsel %vm57, %v139, 0.0
    %144 = vadd.xlane.f32.xlu0 %v143
    %v145 = vpop.xlane.xlu0 %144
    %v146 = vsel %vm57, %v140, 0.0
    %147 = vadd.xlane.f32.xlu0 %v146
    %v148 = vpop.xlane.xlu0 %147
    %v149 = vrcp.pop 32.0
    %v150 = vmul.f32 %v145, %v149
    %v151 = vmul.f32 %v148, %v149
    %v152 = vsub.f32 %v139, %v150
    %v153 = vsub.f32 %v140, %v151
    %v154 = vmul.f32 %v152, %v152
    %v155 = vmul.f32 %v153, %v153
    %v156 = vsel %vm57, %v154, 0.0
    %157 = vadd.xlane.f32.xlu0 %v156
    %v158 = vpop.xlane.xlu0 %157
    %v159 = vsel %vm57, %v155, 0.0
    %160 = vadd.xlane.f32.xlu0 %v159
    %v161 = vpop.xlane.xlu0 %160
    %v162 = vmul.f32 %v158, %v149
    %v163 = vmul.f32 %v161, %v149
    %v164 = vadd.f32 %v162, 1e-05
    %v165 = vadd.f32 %v163, 1e-05
    %v166 = vrsqrt.pop %v164
    %v167 = vrsqrt.pop %v165
    %v168 = vmul.f32 %v152, %v166
    %v169 = vmul.f32 %v153, %v167
    %v171 = vlaneseq
    %v172 = vshrl.u32 %v171, 7
    %v173 = vsub.s32 0, %v172
    %v174 = vrot.slane %v141, %v173
    %v176 = vmul.f32 %v168, %v174
    %v177 = vmul.f32 %v169, %v174
    %v179 = vlaneseq
    %v180 = vshrl.u32 %v179, 7
    %v181 = vsub.s32 0, %v180
    %v182 = vrot.slane %v142, %v181
    %v184 = vadd.f32 %v176, %v182
    %v185 = vadd.f32 %v177, %v182
    %v186 = vld [vmem:[%s4] sm:$0xff]
    %v187 = vld [vmem:[%s4 + $0x8] sm:$0xff]
    %v188 = vld [vmem:[%s4 + $0x10] sm:$0xff]
    %v189 = vld [vmem:[%s4 + $0x18] sm:$0xff]
    %v190 = vld [vmem:[%s5] sm:$0x1]
    %v192 = vlaneseq
    %v193 = vshrl.u32 %v192, 7
    %v194 = vsub.s32 0, %v193
    %v195 = vrot.slane %v190, %v194
    %v198 = vsel %vm57, %v184, 0
    %v201 = vsel %vm57, %v185, 0
    %203 = vmatprep.subr.mxu0 0.0
    %204 = vmatpush1.msra.mxu0 %v186
    %205 = vmatprep.subr.mxu0 0.0
    %206 = vmatpush1.msra.mxu0 %v187
    %207 = vmatprep.subr.mxu0 0.0
    %208 = vmatpush1.msra.mxu0 %v188
    %209 = vmatprep.subr.mxu0 0.0
    %210 = vmatpush1.msra.mxu0 %v189
    %211 = vmatprep.subr.mxu0 0.0
    %212 = vmatpush1.msra.mxu0 0.0
    %213 = vmatprep.subr.mxu0 0.0
    %214 = vmatpush1.msra.mxu0 0.0
    %215 = vmatprep.subr.mxu0 0.0
    %216 = vmatpush1.msra.mxu0 0.0
    %217 = vmatprep.subr.mxu0 0.0
    %218 = vmatpush1.msra.mxu0 0.0
    %219 = vmatprep.subr.mxu0 0.0
    %220 = vmatpush1.msra.mxu0 0.0
    %221 = vmatprep.subr.mxu0 0.0
    %222 = vmatpush1.msra.mxu0 0.0
    %223 = vmatprep.subr.mxu0 0.0
    %224 = vmatpush1.msra.mxu0 0.0
    %225 = vmatprep.subr.mxu0 0.0
    %226 = vmatpush1.msra.mxu0 0.0
    %227 = vmatprep.subr.mxu0 0.0
    %228 = vmatpush1.msra.mxu0 0.0
    %229 = vmatprep.subr.mxu0 0.0
    %230 = vmatpush1.msra.mxu0 0.0
    %231 = vmatprep.subr.mxu0 0.0
    %232 = vmatpush1.msra.mxu0 0.0
    %233 = vmatprep.subr.mxu0 0.0
    %234 = vmatpush1.msra.mxu0 0.0
    %235 = vmatprep.subr.mxu0 0.0
    %236 = vmatpush1.msra.mxu0 0.0
    %237 = vmatprep.subr.mxu0 0.0
    %238 = vmatpush1.msra.mxu0 0.0
    %239 = vmatprep.subr.mxu0 0.0
    %240 = vmatpush1.msra.mxu0 0.0
    %241 = vmatprep.subr.mxu0 0.0
    %242 = vmatpush1.msra.mxu0 0.0
    %243 = vmatprep.subr.mxu0 0.0
    %244 = vmatpush1.msra.mxu0 0.0
    %245 = vmatprep.subr.mxu0 0.0
    %246 = vmatpush1.msra.mxu0 0.0
    %247 = vmatprep.subr.mxu0 0.0
    %248 = vmatpush1.msra.mxu0 0.0
    %249 = vmatprep.subr.mxu0 0.0
    %250 = vmatpush1.msra.mxu0 0.0
    %251 = vmatprep.subr.mxu0 0.0
    %252 = vmatpush1.msra.mxu0 0.0
    %253 = vmatprep.subr.mxu0 0.0
    %254 = vmatpush1.msra.mxu0 0.0
    %255 = vmatprep.subr.mxu0 0.0
    %256 = vmatpush1.msra.mxu0 0.0
    %257 = vmatprep.subr.mxu0 0.0
    %258 = vmatpush1.msra.mxu0 0.0
    %259 = vmatprep.subr.mxu0 0.0
    %260 = vmatpush1.msra.mxu0 0.0
    %261 = vmatprep.subr.mxu0 0.0
    %262 = vmatpush1.msra.mxu0 0.0
    %263 = vmatprep.subr.mxu0 0.0
    %264 = vmatpush1.msra.mxu0 0.0
    %265 = vmatprep.subr.mxu0 0.0
    %266 = vmatpush1.msra.mxu0 0.0
    %267 = vmatprep.mubr.f32.mxu0 0.0
    %268 = vmatmul.mubr.f32.gmra.mrb[0].mxu0 %v198
    %v269 = vpop.f32.mrb[0].mxu0
    %v270 = vadd.f32 %v195, %v269
    %v271 = vpop.f32.mrb[0].mxu0
    %272 = vmatprep.mubr.f32.mxu0 0.0
    %273 = vmatmul.mubr.f32.gmra.mrb[0].mxu0 %v201
    %v274 = vpop.f32.mrb[0].mxu0
    %v275 = vadd.f32 %v195, %v274
    %v276 = vpop.f32.mrb[0].mxu0
    %277 = vdwg.mxu0
    %v278 = vmul.f32 %v270, 0.5
    %v279 = vmul.f32 %v275, 0.5
    %v280 = vmul.f32 %v270, 0.70710677
    %v281 = vmul.f32 %v275, 0.70710677
    %v282 = verf.f32.pop %v280
    %v283 = verf.f32.pop %v281
    %v284 = vadd.f32 %v282, 1.0
    %v285 = vadd.f32 %v283, 1.0
    %v286 = vmul.f32 %v278, %v284
    %v287 = vmul.f32 %v279, %v285
    %v288 = vld [vmem:[%s6] sm:$0xff]
    %v289 = vld [vmem:[%s6 + $0x8] sm:$0xff]
    %v290 = vld [vmem:[%s6 + $0x10] sm:$0xff]
    %v291 = vld [vmem:[%s6 + $0x18] sm:$0xff]
    %v292 = vld [vmem:[%s6 + $0x20] sm:$0xff]
    %v293 = vld [vmem:[%s6 + $0x28] sm:$0xff]
    %v294 = vld [vmem:[%s6 + $0x30] sm:$0xff]
    %v295 = vld [vmem:[%s6 + $0x38] sm:$0xff]
    %v296 = vld [vmem:[%s7] sm:$0x1]
    %v298 = vlaneseq
    %v299 = vshrl.u32 %v298, 7
    %v300 = vsub.s32 0, %v299
    %v301 = vrot.slane %v296, %v300
    %vm303 = vcmask 523264
    %v305 = vsel %vm303, %v286, 0
    %v308 = vsel %vm303, %v287, 0
    %310 = vmatprep.subr.mxu0 0.0
    %311 = vmatpush1.msra.mxu0 %v288
    %312 = vmatprep.subr.mxu0 0.0
    %313 = vmatpush1.msra.mxu0 %v289
    %314 = vmatprep.subr.mxu0 0.0
    %315 = vmatpush1.msra.mxu0 %v290
    %316 = vmatprep.subr.mxu0 0.0
    %317 = vmatpush1.msra.mxu0 %v291
    %318 = vmatprep.subr.mxu0 0.0
    %319 = vmatpush1.msra.mxu0 %v292
    %320 = vmatprep.subr.mxu0 0.0
    %321 = vmatpush1.msra.mxu0 %v293
    %322 = vmatprep.subr.mxu0 0.0
    %323 = vmatpush1.msra.mxu0 %v294
    %324 = vmatprep.subr.mxu0 0.0
    %325 = vmatpush1.msra.mxu0 %v295
    %326 = vmatprep.subr.mxu0 0.0
    %327 = vmatpush1.msra.mxu0 0.0
    %328 = vmatprep.subr.mxu0 0.0
    %329 = vmatpush1.msra.mxu0 0.0
    %330 = vmatprep.subr.mxu0 0.0
    %331 = vmatpush1.msra.mxu0 0.0
    %332 = vmatprep.subr.mxu0 0.0
    %333 = vmatpush1.msra.mxu0 0.0
    %334 = vmatprep.subr.mxu0 0.0
    %335 = vmatpush1.msra.mxu0 0.0
    %336 = vmatprep.subr.mxu0 0.0
    %337 = vmatpush1.msra.mxu0 0.0
    %338 = vmatprep.subr.mxu0 0.0
    %339 = vmatpush1.msra.mxu0 0.0
    %340 = vmatprep.subr.mxu0 0.0
    %341 = vmatpush1.msra.mxu0 0.0
    %342 = vmatprep.subr.mxu0 0.0
    %343 = vmatpush1.msra.mxu0 0.0
    %344 = vmatprep.subr.mxu0 0.0
    %345 = vmatpush1.msra.mxu0 0.0
    %346 = vmatprep.subr.mxu0 0.0
    %347 = vmatpush1.msra.mxu0 0.0
    %348 = vmatprep.subr.mxu0 0.0
    %349 = vmatpush1.msra.mxu0 0.0
    %350 = vmatprep.subr.mxu0 0.0
    %351 = vmatpush1.msra.mxu0 0.0
    %352 = vmatprep.subr.mxu0 0.0
    %353 = vmatpush1.msra.mxu0 0.0
    %354 = vmatprep.subr.mxu0 0.0
    %355 = vmatpush1.msra.mxu0 0.0
    %356 = vmatprep.subr.mxu0 0.0
    %357 = vmatpush1.msra.mxu0 0.0
    %358 = vmatprep.subr.mxu0 0.0
    %359 = vmatpush1.msra.mxu0 0.0
    %360 = vmatprep.subr.mxu0 0.0
    %361 = vmatpush1.msra.mxu0 0.0
    %362 = vmatprep.subr.mxu0 0.0
    %363 = vmatpush1.msra.mxu0 0.0
    %364 = vmatprep.subr.mxu0 0.0
    %365 = vmatpush1.msra.mxu0 0.0
    %366 = vmatprep.subr.mxu0 0.0
    %367 = vmatpush1.msra.mxu0 0.0
    %368 = vmatprep.subr.mxu0 0.0
    %369 = vmatpush1.msra.mxu0 0.0
    %370 = vmatprep.subr.mxu0 0.0
    %371 = vmatpush1.msra.mxu0 0.0
    %372 = vmatprep.subr.mxu0 0.0
    %373 = vmatpush1.msra.mxu0 0.0
    %374 = vmatprep.mubr.f32.mxu0 0.0
    %375 = vmatmul.mubr.f32.gmra.mrb[0].mxu0 %v305
    %v376 = vpop.f32.mrb[0].mxu0
    %v377 = vadd.f32 %v301, %v376
    %v378 = vpop.f32.mrb[0].mxu0
    %379 = vmatprep.mubr.f32.mxu0 0.0
    %380 = vmatmul.mubr.f32.gmra.mrb[0].mxu0 %v308
    %v381 = vpop.f32.mrb[0].mxu0
    %v382 = vadd.f32 %v301, %v381
    %v383 = vpop.f32.mrb[0].mxu0
    %384 = vdwg.mxu0
    %v385 = vadd.f32 %v184, %v377
    %v386 = vadd.f32 %v185, %v382
    %v387 = vld [vmem:[%s10] sm:$0x1]
    %v388 = vld [vmem:[%s11] sm:$0x1]
    %v389 = vsel %vm57, %v385, 0.0
    %390 = vadd.xlane.f32.xlu0 %v389
    %v391 = vpop.xlane.xlu0 %390
    %v392 = vsel %vm57, %v386, 0.0
    %393 = vadd.xlane.f32.xlu0 %v392
    %v394 = vpop.xlane.xlu0 %393
    %v395 = vmul.f32 %v391, %v149
    %v396 = vmul.f32 %v394, %v149
    %v397 = vsub.f32 %v385, %v395
    %v398 = vsub.f32 %v386, %v396
    %v399 = vmul.f32 %v397, %v397
    %v400 = vmul.f32 %v398, %v398
    %v401 = vsel %vm57, %v399, 0.0
    %402 = vadd.xlane.f32.xlu0 %v401
    %v403 = vpop.xlane.xlu0 %402
    %v404 = vsel %vm57, %v400, 0.0
    %405 = vadd.xlane.f32.xlu0 %v404
    %v406 = vpop.xlane.xlu0 %405
    %v407 = vmul.f32 %v403, %v149
    %v408 = vmul.f32 %v406, %v149
    %v409 = vadd.f32 %v407, 1e-05
    %v410 = vadd.f32 %v408, 1e-05
    %v411 = vrsqrt.pop %v409
    %v412 = vrsqrt.pop %v410
    %v413 = vmul.f32 %v397, %v411
    %v414 = vmul.f32 %v398, %v412
    %v416 = vlaneseq
    %v417 = vshrl.u32 %v416, 7
    %v418 = vsub.s32 0, %v417
    %v419 = vrot.slane %v387, %v418
    %v421 = vmul.f32 %v413, %v419
    %v422 = vmul.f32 %v414, %v419
    %v424 = vlaneseq
    %v425 = vshrl.u32 %v424, 7
    %v426 = vsub.s32 0, %v425
    %v427 = vrot.slane %v388, %v426
    %v429 = vadd.f32 %v421, %v427
    %v430 = vadd.f32 %v422, %v427
    %431 = vst.msk [vmem:[#allocation2] sm:$0xff] %vm57, %v429
    %432 = vst.msk [vmem:[#allocation2 + $0x8] sm:$0xff] %vm57, %v430
    // Predicated region
    $region50: #{encoder_layer_pallas.5} parent=1 // pred_check
      _
    $region51: #{encoder_layer_pallas.5} parent=1 // pred_check_branch
      %434 = sbr.rel (0) target = $region53
    $region52: #{encoder_layer_pallas.5} parent=1 // pred_region
      %s436 = ssub.s32 256, 256
      %437 = vsyncadd [#allocation3], %s436
      %s438 = sshll.u32 [#allocation2], 4
      %s439 = int_to_ptr.vmem [resolvable:$true] %s438
      %444 = dma.vmem_to_hbm [thread:$0]  %s439, 256, %s12, [#allocation3], 128, 128, 8
    $region53: #{encoder_layer_pallas.5} parent=1 // pred_fallthru
      _
    // Predicated region
    $region54: #{encoder_layer_pallas.5} parent=1 // pred_check
      _
    $region55: #{encoder_layer_pallas.5} parent=1 // pred_check_branch
      %446 = sbr.rel (0) target = $region57
    $region56: #{encoder_layer_pallas.5} parent=1 // pred_region
      %447 = dma.done [#allocation3], 256
    $region57: #{encoder_layer_pallas.5} parent=1 // pred_fallthru
      _
    %448 = vsyncpa [#allocation3], 1

</llo_original>
